<compile_context>
chip_gen: v5e
topology: v5e:2x2
jax: 0.10.0
libtpu: 0.0.40
codegen_flags: <defaults>
</compile_context>

<pallas_src>
import numpy as np
import jax
import jax.numpy as jnp
from jax.experimental import pallas as pl
from jax.experimental.pallas import tpu as pltpu

# Fixed geometry from the PyTorch module (expects input (N, 3, 32, 32)).
CIN, COUT = 3, 32
H = W = 32
KH = KW = 2
STRIDE, PAD = 2, 2
HOUT = (H + 2 * PAD - KH) // STRIDE + 1   # 18
WOUT = (W + 2 * PAD - KW) // STRIDE + 1   # 18
HI = H // STRIDE                          # 16 interior output rows
WI = W // STRIDE                          # 16 interior output cols
KTAPS = KW * CIN * KH                     # 12 contracted taps (kw, c, kh)


# ----------------------------- Pallas kernel ------------------------------- #
def _conv1_fused_kernel(x_ref, s_ref, w_ref, o_ref, b_ref, p_ref):
    """One image per grid step.

    x_ref : (1, CIN*H, W)          image, NCHW flattened to 2-D (bitcast view)
    s_ref : (W, KW*WI) = (32, 32)  constant 0/1 stride-2 column-tap selector
    w_ref : (COUT, KTAPS)=(32, 12) compact conv weight, columns ordered (kw,c,kh)
    o_ref : (1, COUT, HOUT*WOUT)   lane-dense output, bitcast-exact to NCHW
    b_ref : (CIN*H, KW*WI)         scratch: column-de-interleaved image
    p_ref : (KTAPS, HOUT*WOUT)     scratch: lane-dense im2col patch slab
    """
    # Stage 1 (MXU): de-interleave even/odd input columns for every row at once:
    #   b[c*H + h, kw*WI + j] = x[c, h, 2j + kw]
    b_ref[...] = jnp.dot(x_ref[0], s_ref[...],
                         preferred_element_type=jnp.float32)

    # Stage 2 (VPU): scatter the interior window taps into a lane-dense
    # (12, 324) patch slab.  Lanes never written stay zero, which realizes the
    # padding=2 border (output rows/cols 0 and 17) for free.
    p_ref[...] = jnp.zeros_like(p_ref)
    for i in range(HI):                              # interior output row (static)
        off = (i + 1) * WOUT + 1                     # lane offset of (row i+1, col 1)
        for c in range(CIN):
            # rows[kh, kw*WI + j] = x[c, 2i + kh, 2j + kw]   -- contiguous 2-row read
            rows = b_ref[pl.ds(c * H + STRIDE * i, KH), :]
            # patch row index = kw*(CIN*KH) + c*KH + kh  (contiguous 2-row stores)
            p_ref[pl.ds(c * KH, KH), pl.ds(off, WI)] = rows[:, :WI]                 # kw = 0
            p_ref[pl.ds(CIN * KH + c * KH, KH), pl.ds(off, WI)] = rows[:, WI:]      # kw = 1

    # Stage 3 (MXU): contract all 12 taps in a single matmul -> (COUT, 324).
    out = jnp.dot(w_ref[...], p_ref[...], preferred_element_type=jnp.float32)
    o_ref[0] = out.astype(o_ref.dtype)


def _conv1_pallas(x3, s_sel, w_cat):
    n = x3.shape[0]
    flops = n * (2 * (CIN * H) * W * (KW * WI)          # stage-1 selector matmul
                 + 2 * COUT * KTAPS * HOUT * WOUT)      # stage-3 weight matmul
    bytes_accessed = 4 * (x3.size + s_sel.size + w_cat.size
                          + n * COUT * HOUT * WOUT)
    return pl.pallas_call(
        _conv1_fused_kernel,
        out_shape=jax.ShapeDtypeStruct((n, COUT, HOUT * WOUT), jnp.float32),
        grid=(n,),
        in_specs=[
            pl.BlockSpec((1, CIN * H, W), lambda b: (b, 0, 0)),      # per-image tile
            pl.BlockSpec((W, KW * WI), lambda b: (0, 0)),            # selector (resident)
            pl.BlockSpec((COUT, KTAPS), lambda b: (0, 0)),           # compact weight
        ],
        out_specs=pl.BlockSpec((1, COUT, HOUT * WOUT), lambda b: (b, 0, 0)),
        scratch_shapes=[
            pltpu.VMEM((CIN * H, KW * WI), jnp.float32),             # b_ref
            pltpu.VMEM((KTAPS, HOUT * WOUT), jnp.float32),           # p_ref
        ],
        compiler_params=pltpu.CompilerParams(
            dimension_semantics=("parallel",)),                      # megacore over batch
        cost_estimate=pl.CostEstimate(flops=flops, transcendentals=0,
                                      bytes_accessed=bytes_accessed),
    )(x3, s_sel, w_cat)


@jax.jit
def conv1_forward(x_nchw, w_conv1, s_sel):
    n, cin, h, w = x_nchw.shape
    assert (cin, h, w) == (CIN, H, W), "UnusedModule expects (N, 3, 32, 32) input"
    x3 = x_nchw.reshape(n, cin * h, w)               # row-major bitcast, no copy
    # Compact weight with columns ordered (kw, c, kh) to match the patch rows.
    # Rebuilt from the raw weight every call (1.5 KB) -> never stale under
    # weight updates (e.g. AdaRound optimization).
    w_cat = jnp.transpose(w_conv1, (0, 3, 1, 2)).reshape(COUT, KTAPS)
    out = _conv1_pallas(x3, s_sel, w_cat)            # (n, COUT, HOUT*WOUT)
    return out.reshape(n, COUT, HOUT, WOUT)          # row-major bitcast, no copy


# --------------------- one-time constant construction ---------------------- #
def _build_column_selector():
    """S[w, kw*WI + j] = 1 iff w == 2*j + kw  (pure geometry, weight-free)."""
    s = np.zeros((W, KW * WI), np.float32)
    for kw in range(KW):
        for j in range(WI):
            s[STRIDE * j + kw, kw * WI + j] = 1.0
    return jnp.asarray(s)


# ------------------------------ Module wrapper ----------------------------- #
class UnusedModulePallas:
    """Mirrors UnusedModule: conv1 + an unused conv2; forward uses only conv1."""

    def __init__(self, key):
        k1, k2 = jax.random.split(key)
        # PyTorch Conv2d weight layout: (Cout, Cin, KH, KW)
        self.w_conv1 = jax.random.normal(k1, (COUT, CIN, KH, KW), jnp.float32) * 0.1
        self.w_conv2 = jax.random.normal(k2, (64, COUT, KH, KW), jnp.float32) * 0.1  # unused, as in the spec
        self._s_sel = _build_column_selector()       # geometry-only 0/1 selector (4 KB)

    def __call__(self, x_nchw):
        return conv1_forward(x_nchw, self.w_conv1, self._s_sel)


# ---------------------------------- main ----------------------------------- #
if __name__ == "__main__":
    key = jax.random.PRNGKey(0)
    k_w, k_x = jax.random.split(key)

    model = UnusedModulePallas(k_w)
    # Batch 2 exercises the parallel batch grid; spatial/channels fixed by the module.
    x = jax.random.normal(k_x, (2, CIN, H, W), jnp.float32)   # NCHW, as in PyTorch

    y = model(x)
    y = jax.block_until_ready(y)
    assert y.shape == (2, COUT, HOUT, WOUT), y.shape

    # Sanity check against XLA's native conv (not part of the kernel path).
    y_ref = jax.lax.conv_general_dilated(
        x, model.w_conv1, window_strides=(STRIDE, STRIDE),
        padding=((PAD, PAD), (PAD, PAD)),
        dimension_numbers=("NCHW", "OIHW", "NCHW"))
    assert jnp.allclose(y, y_ref, atol=1e-4, rtol=1e-4), \
        float(jnp.max(jnp.abs(y - y_ref)))

    print("KERNEL_OK")
</pallas_src>

<mosaic_0001>
module attributes {stable_mosaic.version = 11 : i64} {
  func.func @_conv1_fused_kernel(%arg0: i32, %arg1: memref<1x96x32xf32, #tpu.memory_space<vmem>>, %arg2: memref<32x32xf32, #tpu.memory_space<vmem>>, %arg3: memref<32x12xf32, #tpu.memory_space<vmem>>, %arg4: memref<1x32x324xf32, #tpu.memory_space<vmem>>, %arg5: memref<96x32xf32, #tpu.memory_space<vmem>>, %arg6: memref<12x324xf32, #tpu.memory_space<vmem>>) attributes {dimension_semantics = [#tpu.dimension_semantics<parallel>], iteration_bounds = array<i64: 2>, scalar_prefetch = 0 : i64, scratch_operands = 2 : i64, tpu.core_type = #tpu.core_type<tc>, window_params = [{transform_indices = @transform_0, window_bounds = array<i64: 1, 96, 32>}, {pipeline_mode = #tpu.pipeline_mode<synchronous>, transform_indices = @transform_1, window_bounds = array<i64: 32, 32>}, {pipeline_mode = #tpu.pipeline_mode<synchronous>, transform_indices = @transform_2, window_bounds = array<i64: 32, 12>}, {transform_indices = @transform_3, window_bounds = array<i64: 1, 32, 324>}]} {
    %c0 = arith.constant 0 : index
    %c0_0 = arith.constant 0 : index
    %c0_1 = arith.constant 0 : index
    %0 = vector.load %arg1[%c0, %c0_0, %c0_1] : memref<1x96x32xf32, #tpu.memory_space<vmem>>, vector<1x96x32xf32>
    %1 = vector.shape_cast %0 : vector<1x96x32xf32> to vector<96x32xf32>
    %c0_2 = arith.constant 0 : index
    %c0_3 = arith.constant 0 : index
    %2 = vector.load %arg2[%c0_2, %c0_3] : memref<32x32xf32, #tpu.memory_space<vmem>>, vector<32x32xf32>
    %cst = arith.constant dense<0.000000e+00> : vector<96x32xf32>
    %3 = tpu.matmul %1, %2, %cst {dimension_numbers = #tpu.dot_dimension_numbers<[1], [0], [0], [1], [0, 0, 1, 1], [], []>} : vector<96x32xf32>, vector<32x32xf32>, vector<96x32xf32> -> vector<96x32xf32>
    %c0_4 = arith.constant 0 : index
    %c0_5 = arith.constant 0 : index
    %4 = vector.load %arg5[%c0_4, %c0_5] : memref<96x32xf32, #tpu.memory_space<vmem>>, vector<96x32xf32>
    tpu.vector_store %arg5[%c0_4, %c0_5], %3 {strides = array<i32>} : memref<96x32xf32, #tpu.memory_space<vmem>>, vector<96x32xf32>,
    %cst_6 = arith.constant 0.000000e+00 : f32
    %5 = vector.broadcast %cst_6 : f32 to vector<12x324xf32>
    %c0_7 = arith.constant 0 : index
    %c0_8 = arith.constant 0 : index
    %6 = vector.load %arg6[%c0_7, %c0_8] : memref<12x324xf32, #tpu.memory_space<vmem>>, vector<12x324xf32>
    tpu.vector_store %arg6[%c0_7, %c0_8], %5 {strides = array<i32>} : memref<12x324xf32, #tpu.memory_space<vmem>>, vector<12x324xf32>,
    %c0_9 = arith.constant 0 : index
    %c0_10 = arith.constant 0 : index
    %7 = vector.load %arg5[%c0_9, %c0_10] : memref<96x32xf32, #tpu.memory_space<vmem>>, vector<2x32xf32>
    %8 = vector.extract_strided_slice %7 {offsets = [0, 0], sizes = [2, 16], strides = [1, 1]} : vector<2x32xf32> to vector<2x16xf32>
    %c0_11 = arith.constant 0 : index
    %c19 = arith.constant 19 : index
    %9 = vector.load %arg6[%c0_11, %c19] : memref<12x324xf32, #tpu.memory_space<vmem>>, vector<2x16xf32>
    tpu.vector_store %arg6[%c0_11, %c19], %8 {strides = array<i32>} : memref<12x324xf32, #tpu.memory_space<vmem>>, vector<2x16xf32>,
    %10 = vector.extract_strided_slice %7 {offsets = [0, 16], sizes = [2, 16], strides = [1, 1]} : vector<2x32xf32> to vector<2x16xf32>
    %c6 = arith.constant 6 : index
    %c19_12 = arith.constant 19 : index
    %11 = vector.load %arg6[%c6, %c19_12] : memref<12x324xf32, #tpu.memory_space<vmem>>, vector<2x16xf32>
    tpu.vector_store %arg6[%c6, %c19_12], %10 {strides = array<i32>} : memref<12x324xf32, #tpu.memory_space<vmem>>, vector<2x16xf32>,
    %c32 = arith.constant 32 : index
    %c0_13 = arith.constant 0 : index
    %12 = vector.load %arg5[%c32, %c0_13] : memref<96x32xf32, #tpu.memory_space<vmem>>, vector<2x32xf32>
    %13 = vector.extract_strided_slice %12 {offsets = [0, 0], sizes = [2, 16], strides = [1, 1]} : vector<2x32xf32> to vector<2x16xf32>
    %c2 = arith.constant 2 : index
    %c19_14 = arith.constant 19 : index
    %14 = vector.load %arg6[%c2, %c19_14] : memref<12x324xf32, #tpu.memory_space<vmem>>, vector<2x16xf32>
    tpu.vector_store %arg6[%c2, %c19_14], %13 {strides = array<i32>} : memref<12x324xf32, #tpu.memory_space<vmem>>, vector<2x16xf32>,
    %15 = vector.extract_strided_slice %12 {offsets = [0, 16], sizes = [2, 16], strides = [1, 1]} : vector<2x32xf32> to vector<2x16xf32>
    %c8 = arith.constant 8 : index
    %c19_15 = arith.constant 19 : index
    %16 = vector.load %arg6[%c8, %c19_15] : memref<12x324xf32, #tpu.memory_space<vmem>>, vector<2x16xf32>
    tpu.vector_store %arg6[%c8, %c19_15], %15 {strides = array<i32>} : memref<12x324xf32, #tpu.memory_space<vmem>>, vector<2x16xf32>,
    %c64 = arith.constant 64 : index
    %c0_16 = arith.constant 0 : index
    %17 = vector.load %arg5[%c64, %c0_16] : memref<96x32xf32, #tpu.memory_space<vmem>>, vector<2x32xf32>
    %18 = vector.extract_strided_slice %17 {offsets = [0, 0], sizes = [2, 16], strides = [1, 1]} : vector<2x32xf32> to vector<2x16xf32>
    %c4 = arith.constant 4 : index
    %c19_17 = arith.constant 19 : index
    %19 = vector.load %arg6[%c4, %c19_17] : memref<12x324xf32, #tpu.memory_space<vmem>>, vector<2x16xf32>
    tpu.vector_store %arg6[%c4, %c19_17], %18 {strides = array<i32>} : memref<12x324xf32, #tpu.memory_space<vmem>>, vector<2x16xf32>,
    %20 = vector.extract_strided_slice %17 {offsets = [0, 16], sizes = [2, 16], strides = [1, 1]} : vector<2x32xf32> to vector<2x16xf32>
    %c10 = arith.constant 10 : index
    %c19_18 = arith.constant 19 : index
    %21 = vector.load %arg6[%c10, %c19_18] : memref<12x324xf32, #tpu.memory_space<vmem>>, vector<2x16xf32>
    tpu.vector_store %arg6[%c10, %c19_18], %20 {strides = array<i32>} : memref<12x324xf32, #tpu.memory_space<vmem>>, vector<2x16xf32>,
    %c2_19 = arith.constant 2 : index
    %c0_20 = arith.constant 0 : index
    %22 = vector.load %arg5[%c2_19, %c0_20] : memref<96x32xf32, #tpu.memory_space<vmem>>, vector<2x32xf32>
    %23 = vector.extract_strided_slice %22 {offsets = [0, 0], sizes = [2, 16], strides = [1, 1]} : vector<2x32xf32> to vector<2x16xf32>
    %c0_21 = arith.constant 0 : index
    %c37 = arith.constant 37 : index
    %24 = vector.load %arg6[%c0_21, %c37] : memref<12x324xf32, #tpu.memory_space<vmem>>, vector<2x16xf32>
    tpu.vector_store %arg6[%c0_21, %c37], %23 {strides = array<i32>} : memref<12x324xf32, #tpu.memory_space<vmem>>, vector<2x16xf32>,
    %25 = vector.extract_strided_slice %22 {offsets = [0, 16], sizes = [2, 16], strides = [1, 1]} : vector<2x32xf32> to vector<2x16xf32>
    %c6_22 = arith.constant 6 : index
    %c37_23 = arith.constant 37 : index
    %26 = vector.load %arg6[%c6_22, %c37_23] : memref<12x324xf32, #tpu.memory_space<vmem>>, vector<2x16xf32>
    tpu.vector_store %arg6[%c6_22, %c37_23], %25 {strides = array<i32>} : memref<12x324xf32, #tpu.memory_space<vmem>>, vector<2x16xf32>,
    %c34 = arith.constant 34 : index
    %c0_24 = arith.constant 0 : index
    %27 = vector.load %arg5[%c34, %c0_24] : memref<96x32xf32, #tpu.memory_space<vmem>>, vector<2x32xf32>
    %28 = vector.extract_strided_slice %27 {offsets = [0, 0], sizes = [2, 16], strides = [1, 1]} : vector<2x32xf32> to vector<2x16xf32>
    %c2_25 = arith.constant 2 : index
    %c37_26 = arith.constant 37 : index
    %29 = vector.load %arg6[%c2_25, %c37_26] : memref<12x324xf32, #tpu.memory_space<vmem>>, vector<2x16xf32>
    tpu.vector_store %arg6[%c2_25, %c37_26], %28 {strides = array<i32>} : memref<12x324xf32, #tpu.memory_space<vmem>>, vector<2x16xf32>,
    %30 = vector.extract_strided_slice %27 {offsets = [0, 16], sizes = [2, 16], strides = [1, 1]} : vector<2x32xf32> to vector<2x16xf32>
    %c8_27 = arith.constant 8 : index
    %c37_28 = arith.constant 37 : index
    %31 = vector.load %arg6[%c8_27, %c37_28] : memref<12x324xf32, #tpu.memory_space<vmem>>, vector<2x16xf32>
    tpu.vector_store %arg6[%c8_27, %c37_28], %30 {strides = array<i32>} : memref<12x324xf32, #tpu.memory_space<vmem>>, vector<2x16xf32>,
    %c66 = arith.constant 66 : index
    %c0_29 = arith.constant 0 : index
    %32 = vector.load %arg5[%c66, %c0_29] : memref<96x32xf32, #tpu.memory_space<vmem>>, vector<2x32xf32>
    %33 = vector.extract_strided_slice %32 {offsets = [0, 0], sizes = [2, 16], strides = [1, 1]} : vector<2x32xf32> to vector<2x16xf32>
    %c4_30 = arith.constant 4 : index
    %c37_31 = arith.constant 37 : index
    %34 = vector.load %arg6[%c4_30, %c37_31] : memref<12x324xf32, #tpu.memory_space<vmem>>, vector<2x16xf32>
    tpu.vector_store %arg6[%c4_30, %c37_31], %33 {strides = array<i32>} : memref<12x324xf32, #tpu.memory_space<vmem>>, vector<2x16xf32>,
    %35 = vector.extract_strided_slice %32 {offsets = [0, 16], sizes = [2, 16], strides = [1, 1]} : vector<2x32xf32> to vector<2x16xf32>
    %c10_32 = arith.constant 10 : index
    %c37_33 = arith.constant 37 : index
    %36 = vector.load %arg6[%c10_32, %c37_33] : memref<12x324xf32, #tpu.memory_space<vmem>>, vector<2x16xf32>
    tpu.vector_store %arg6[%c10_32, %c37_33], %35 {strides = array<i32>} : memref<12x324xf32, #tpu.memory_space<vmem>>, vector<2x16xf32>,
    %c4_34 = arith.constant 4 : index
    %c0_35 = arith.constant 0 : index
    %37 = vector.load %arg5[%c4_34, %c0_35] : memref<96x32xf32, #tpu.memory_space<vmem>>, vector<2x32xf32>
    %38 = vector.extract_strided_slice %37 {offsets = [0, 0], sizes = [2, 16], strides = [1, 1]} : vector<2x32xf32> to vector<2x16xf32>
    %c0_36 = arith.constant 0 : index
    %c55 = arith.constant 55 : index
    %39 = vector.load %arg6[%c0_36, %c55] : memref<12x324xf32, #tpu.memory_space<vmem>>, vector<2x16xf32>
    tpu.vector_store %arg6[%c0_36, %c55], %38 {strides = array<i32>} : memref<12x324xf32, #tpu.memory_space<vmem>>, vector<2x16xf32>,
    %40 = vector.extract_strided_slice %37 {offsets = [0, 16], sizes = [2, 16], strides = [1, 1]} : vector<2x32xf32> to vector<2x16xf32>
    %c6_37 = arith.constant 6 : index
    %c55_38 = arith.constant 55 : index
    %41 = vector.load %arg6[%c6_37, %c55_38] : memref<12x324xf32, #tpu.memory_space<vmem>>, vector<2x16xf32>
    tpu.vector_store %arg6[%c6_37, %c55_38], %40 {strides = array<i32>} : memref<12x324xf32, #tpu.memory_space<vmem>>, vector<2x16xf32>,
    %c36 = arith.constant 36 : index
    %c0_39 = arith.constant 0 : index
    %42 = vector.load %arg5[%c36, %c0_39] : memref<96x32xf32, #tpu.memory_space<vmem>>, vector<2x32xf32>
    %43 = vector.extract_strided_slice %42 {offsets = [0, 0], sizes = [2, 16], strides = [1, 1]} : vector<2x32xf32> to vector<2x16xf32>
    %c2_40 = arith.constant 2 : index
    %c55_41 = arith.constant 55 : index
    %44 = vector.load %arg6[%c2_40, %c55_41] : memref<12x324xf32, #tpu.memory_space<vmem>>, vector<2x16xf32>
    tpu.vector_store %arg6[%c2_40, %c55_41], %43 {strides = array<i32>} : memref<12x324xf32, #tpu.memory_space<vmem>>, vector<2x16xf32>,
    %45 = vector.extract_strided_slice %42 {offsets = [0, 16], sizes = [2, 16], strides = [1, 1]} : vector<2x32xf32> to vector<2x16xf32>
    %c8_42 = arith.constant 8 : index
    %c55_43 = arith.constant 55 : index
    %46 = vector.load %arg6[%c8_42, %c55_43] : memref<12x324xf32, #tpu.memory_space<vmem>>, vector<2x16xf32>
    tpu.vector_store %arg6[%c8_42, %c55_43], %45 {strides = array<i32>} : memref<12x324xf32, #tpu.memory_space<vmem>>, vector<2x16xf32>,
    %c68 = arith.constant 68 : index
    %c0_44 = arith.constant 0 : index
    %47 = vector.load %arg5[%c68, %c0_44] : memref<96x32xf32, #tpu.memory_space<vmem>>, vector<2x32xf32>
    %48 = vector.extract_strided_slice %47 {offsets = [0, 0], sizes = [2, 16], strides = [1, 1]} : vector<2x32xf32> to vector<2x16xf32>
    %c4_45 = arith.constant 4 : index
    %c55_46 = arith.constant 55 : index
    %49 = vector.load %arg6[%c4_45, %c55_46] : memref<12x324xf32, #tpu.memory_space<vmem>>, vector<2x16xf32>
    tpu.vector_store %arg6[%c4_45, %c55_46], %48 {strides = array<i32>} : memref<12x324xf32, #tpu.memory_space<vmem>>, vector<2x16xf32>,
    %50 = vector.extract_strided_slice %47 {offsets = [0, 16], sizes = [2, 16], strides = [1, 1]} : vector<2x32xf32> to vector<2x16xf32>
    %c10_47 = arith.constant 10 : index
    %c55_48 = arith.constant 55 : index
    %51 = vector.load %arg6[%c10_47, %c55_48] : memref<12x324xf32, #tpu.memory_space<vmem>>, vector<2x16xf32>
    tpu.vector_store %arg6[%c10_47, %c55_48], %50 {strides = array<i32>} : memref<12x324xf32, #tpu.memory_space<vmem>>, vector<2x16xf32>,
    %c6_49 = arith.constant 6 : index
    %c0_50 = arith.constant 0 : index
    %52 = vector.load %arg5[%c6_49, %c0_50] : memref<96x32xf32, #tpu.memory_space<vmem>>, vector<2x32xf32>
    %53 = vector.extract_strided_slice %52 {offsets = [0, 0], sizes = [2, 16], strides = [1, 1]} : vector<2x32xf32> to vector<2x16xf32>
    %c0_51 = arith.constant 0 : index
    %c73 = arith.constant 73 : index
    %54 = vector.load %arg6[%c0_51, %c73] : memref<12x324xf32, #tpu.memory_space<vmem>>, vector<2x16xf32>
    tpu.vector_store %arg6[%c0_51, %c73], %53 {strides = array<i32>} : memref<12x324xf32, #tpu.memory_space<vmem>>, vector<2x16xf32>,
    %55 = vector.extract_strided_slice %52 {offsets = [0, 16], sizes = [2, 16], strides = [1, 1]} : vector<2x32xf32> to vector<2x16xf32>
    %c6_52 = arith.constant 6 : index
    %c73_53 = arith.constant 73 : index
    %56 = vector.load %arg6[%c6_52, %c73_53] : memref<12x324xf32, #tpu.memory_space<vmem>>, vector<2x16xf32>
    tpu.vector_store %arg6[%c6_52, %c73_53], %55 {strides = array<i32>} : memref<12x324xf32, #tpu.memory_space<vmem>>, vector<2x16xf32>,
    %c38 = arith.constant 38 : index
    %c0_54 = arith.constant 0 : index
    %57 = vector.load %arg5[%c38, %c0_54] : memref<96x32xf32, #tpu.memory_space<vmem>>, vector<2x32xf32>
    %58 = vector.extract_strided_slice %57 {offsets = [0, 0], sizes = [2, 16], strides = [1, 1]} : vector<2x32xf32> to vector<2x16xf32>
    %c2_55 = arith.constant 2 : index
    %c73_56 = arith.constant 73 : index
    %59 = vector.load %arg6[%c2_55, %c73_56] : memref<12x324xf32, #tpu.memory_space<vmem>>, vector<2x16xf32>
    tpu.vector_store %arg6[%c2_55, %c73_56], %58 {strides = array<i32>} : memref<12x324xf32, #tpu.memory_space<vmem>>, vector<2x16xf32>,
    %60 = vector.extract_strided_slice %57 {offsets = [0, 16], sizes = [2, 16], strides = [1, 1]} : vector<2x32xf32> to vector<2x16xf32>
    %c8_57 = arith.constant 8 : index
    %c73_58 = arith.constant 73 : index
    %61 = vector.load %arg6[%c8_57, %c73_58] : memref<12x324xf32, #tpu.memory_space<vmem>>, vector<2x16xf32>
    tpu.vector_store %arg6[%c8_57, %c73_58], %60 {strides = array<i32>} : memref<12x324xf32, #tpu.memory_space<vmem>>, vector<2x16xf32>,
    %c70 = arith.constant 70 : index
    %c0_59 = arith.constant 0 : index
    %62 = vector.load %arg5[%c70, %c0_59] : memref<96x32xf32, #tpu.memory_space<vmem>>, vector<2x32xf32>
    %63 = vector.extract_strided_slice %62 {offsets = [0, 0], sizes = [2, 16], strides = [1, 1]} : vector<2x32xf32> to vector<2x16xf32>
    %c4_60 = arith.constant 4 : index
    %c73_61 = arith.constant 73 : index
    %64 = vector.load %arg6[%c4_60, %c73_61] : memref<12x324xf32, #tpu.memory_space<vmem>>, vector<2x16xf32>
    tpu.vector_store %arg6[%c4_60, %c73_61], %63 {strides = array<i32>} : memref<12x324xf32, #tpu.memory_space<vmem>>, vector<2x16xf32>,
    %65 = vector.extract_strided_slice %62 {offsets = [0, 16], sizes = [2, 16], strides = [1, 1]} : vector<2x32xf32> to vector<2x16xf32>
    %c10_62 = arith.constant 10 : index
    %c73_63 = arith.constant 73 : index
    %66 = vector.load %arg6[%c10_62, %c73_63] : memref<12x324xf32, #tpu.memory_space<vmem>>, vector<2x16xf32>
    tpu.vector_store %arg6[%c10_62, %c73_63], %65 {strides = array<i32>} : memref<12x324xf32, #tpu.memory_space<vmem>>, vector<2x16xf32>,
    %c8_64 = arith.constant 8 : index
    %c0_65 = arith.constant 0 : index
    %67 = vector.load %arg5[%c8_64, %c0_65] : memref<96x32xf32, #tpu.memory_space<vmem>>, vector<2x32xf32>
    %68 = vector.extract_strided_slice %67 {offsets = [0, 0], sizes = [2, 16], strides = [1, 1]} : vector<2x32xf32> to vector<2x16xf32>
    %c0_66 = arith.constant 0 : index
    %c91 = arith.constant 91 : index
    %69 = vector.load %arg6[%c0_66, %c91] : memref<12x324xf32, #tpu.memory_space<vmem>>, vector<2x16xf32>
    tpu.vector_store %arg6[%c0_66, %c91], %68 {strides = array<i32>} : memref<12x324xf32, #tpu.memory_space<vmem>>, vector<2x16xf32>,
    %70 = vector.extract_strided_slice %67 {offsets = [0, 16], sizes = [2, 16], strides = [1, 1]} : vector<2x32xf32> to vector<2x16xf32>
    %c6_67 = arith.constant 6 : index
    %c91_68 = arith.constant 91 : index
    %71 = vector.load %arg6[%c6_67, %c91_68] : memref<12x324xf32, #tpu.memory_space<vmem>>, vector<2x16xf32>
    tpu.vector_store %arg6[%c6_67, %c91_68], %70 {strides = array<i32>} : memref<12x324xf32, #tpu.memory_space<vmem>>, vector<2x16xf32>,
    %c40 = arith.constant 40 : index
    %c0_69 = arith.constant 0 : index
    %72 = vector.load %arg5[%c40, %c0_69] : memref<96x32xf32, #tpu.memory_space<vmem>>, vector<2x32xf32>
    %73 = vector.extract_strided_slice %72 {offsets = [0, 0], sizes = [2, 16], strides = [1, 1]} : vector<2x32xf32> to vector<2x16xf32>
    %c2_70 = arith.constant 2 : index
    %c91_71 = arith.constant 91 : index
    %74 = vector.load %arg6[%c2_70, %c91_71] : memref<12x324xf32, #tpu.memory_space<vmem>>, vector<2x16xf32>
    tpu.vector_store %arg6[%c2_70, %c91_71], %73 {strides = array<i32>} : memref<12x324xf32, #tpu.memory_space<vmem>>, vector<2x16xf32>,
    %75 = vector.extract_strided_slice %72 {offsets = [0, 16], sizes = [2, 16], strides = [1, 1]} : vector<2x32xf32> to vector<2x16xf32>
    %c8_72 = arith.constant 8 : index
    %c91_73 = arith.constant 91 : index
    %76 = vector.load %arg6[%c8_72, %c91_73] : memref<12x324xf32, #tpu.memory_space<vmem>>, vector<2x16xf32>
    tpu.vector_store %arg6[%c8_72, %c91_73], %75 {strides = array<i32>} : memref<12x324xf32, #tpu.memory_space<vmem>>, vector<2x16xf32>,
    %c72 = arith.constant 72 : index
    %c0_74 = arith.constant 0 : index
    %77 = vector.load %arg5[%c72, %c0_74] : memref<96x32xf32, #tpu.memory_space<vmem>>, vector<2x32xf32>
    %78 = vector.extract_strided_slice %77 {offsets = [0, 0], sizes = [2, 16], strides = [1, 1]} : vector<2x32xf32> to vector<2x16xf32>
    %c4_75 = arith.constant 4 : index
    %c91_76 = arith.constant 91 : index
    %79 = vector.load %arg6[%c4_75, %c91_76] : memref<12x324xf32, #tpu.memory_space<vmem>>, vector<2x16xf32>
    tpu.vector_store %arg6[%c4_75, %c91_76], %78 {strides = array<i32>} : memref<12x324xf32, #tpu.memory_space<vmem>>, vector<2x16xf32>,
    %80 = vector.extract_strided_slice %77 {offsets = [0, 16], sizes = [2, 16], strides = [1, 1]} : vector<2x32xf32> to vector<2x16xf32>
    %c10_77 = arith.constant 10 : index
    %c91_78 = arith.constant 91 : index
    %81 = vector.load %arg6[%c10_77, %c91_78] : memref<12x324xf32, #tpu.memory_space<vmem>>, vector<2x16xf32>
    tpu.vector_store %arg6[%c10_77, %c91_78], %80 {strides = array<i32>} : memref<12x324xf32, #tpu.memory_space<vmem>>, vector<2x16xf32>,
    %c10_79 = arith.constant 10 : index
    %c0_80 = arith.constant 0 : index
    %82 = vector.load %arg5[%c10_79, %c0_80] : memref<96x32xf32, #tpu.memory_space<vmem>>, vector<2x32xf32>
    %83 = vector.extract_strided_slice %82 {offsets = [0, 0], sizes = [2, 16], strides = [1, 1]} : vector<2x32xf32> to vector<2x16xf32>
    %c0_81 = arith.constant 0 : index
    %c109 = arith.constant 109 : index
    %84 = vector.load %arg6[%c0_81, %c109] : memref<12x324xf32, #tpu.memory_space<vmem>>, vector<2x16xf32>
    tpu.vector_store %arg6[%c0_81, %c109], %83 {strides = array<i32>} : memref<12x324xf32, #tpu.memory_space<vmem>>, vector<2x16xf32>,
    %85 = vector.extract_strided_slice %82 {offsets = [0, 16], sizes = [2, 16], strides = [1, 1]} : vector<2x32xf32> to vector<2x16xf32>
    %c6_82 = arith.constant 6 : index
    %c109_83 = arith.constant 109 : index
    %86 = vector.load %arg6[%c6_82, %c109_83] : memref<12x324xf32, #tpu.memory_space<vmem>>, vector<2x16xf32>
    tpu.vector_store %arg6[%c6_82, %c109_83], %85 {strides = array<i32>} : memref<12x324xf32, #tpu.memory_space<vmem>>, vector<2x16xf32>,
    %c42 = arith.constant 42 : index
    %c0_84 = arith.constant 0 : index
    %87 = vector.load %arg5[%c42, %c0_84] : memref<96x32xf32, #tpu.memory_space<vmem>>, vector<2x32xf32>
    %88 = vector.extract_strided_slice %87 {offsets = [0, 0], sizes = [2, 16], strides = [1, 1]} : vector<2x32xf32> to vector<2x16xf32>
    %c2_85 = arith.constant 2 : index
    %c109_86 = arith.constant 109 : index
    %89 = vector.load %arg6[%c2_85, %c109_86] : memref<12x324xf32, #tpu.memory_space<vmem>>, vector<2x16xf32>
    tpu.vector_store %arg6[%c2_85, %c109_86], %88 {strides = array<i32>} : memref<12x324xf32, #tpu.memory_space<vmem>>, vector<2x16xf32>,
    %90 = vector.extract_strided_slice %87 {offsets = [0, 16], sizes = [2, 16], strides = [1, 1]} : vector<2x32xf32> to vector<2x16xf32>
    %c8_87 = arith.constant 8 : index
    %c109_88 = arith.constant 109 : index
    %91 = vector.load %arg6[%c8_87, %c109_88] : memref<12x324xf32, #tpu.memory_space<vmem>>, vector<2x16xf32>
    tpu.vector_store %arg6[%c8_87, %c109_88], %90 {strides = array<i32>} : memref<12x324xf32, #tpu.memory_space<vmem>>, vector<2x16xf32>,
    %c74 = arith.constant 74 : index
    %c0_89 = arith.constant 0 : index
    %92 = vector.load %arg5[%c74, %c0_89] : memref<96x32xf32, #tpu.memory_space<vmem>>, vector<2x32xf32>
    %93 = vector.extract_strided_slice %92 {offsets = [0, 0], sizes = [2, 16], strides = [1, 1]} : vector<2x32xf32> to vector<2x16xf32>
    %c4_90 = arith.constant 4 : index
    %c109_91 = arith.constant 109 : index
    %94 = vector.load %arg6[%c4_90, %c109_91] : memref<12x324xf32, #tpu.memory_space<vmem>>, vector<2x16xf32>
    tpu.vector_store %arg6[%c4_90, %c109_91], %93 {strides = array<i32>} : memref<12x324xf32, #tpu.memory_space<vmem>>, vector<2x16xf32>,
    %95 = vector.extract_strided_slice %92 {offsets = [0, 16], sizes = [2, 16], strides = [1, 1]} : vector<2x32xf32> to vector<2x16xf32>
    %c10_92 = arith.constant 10 : index
    %c109_93 = arith.constant 109 : index
    %96 = vector.load %arg6[%c10_92, %c109_93] : memref<12x324xf32, #tpu.memory_space<vmem>>, vector<2x16xf32>
    tpu.vector_store %arg6[%c10_92, %c109_93], %95 {strides = array<i32>} : memref<12x324xf32, #tpu.memory_space<vmem>>, vector<2x16xf32>,
    %c12 = arith.constant 12 : index
    %c0_94 = arith.constant 0 : index
    %97 = vector.load %arg5[%c12, %c0_94] : memref<96x32xf32, #tpu.memory_space<vmem>>, vector<2x32xf32>
    %98 = vector.extract_strided_slice %97 {offsets = [0, 0], sizes = [2, 16], strides = [1, 1]} : vector<2x32xf32> to vector<2x16xf32>
    %c0_95 = arith.constant 0 : index
    %c127 = arith.constant 127 : index
    %99 = vector.load %arg6[%c0_95, %c127] : memref<12x324xf32, #tpu.memory_space<vmem>>, vector<2x16xf32>
    tpu.vector_store %arg6[%c0_95, %c127], %98 {strides = array<i32>} : memref<12x324xf32, #tpu.memory_space<vmem>>, vector<2x16xf32>,
    %100 = vector.extract_strided_slice %97 {offsets = [0, 16], sizes = [2, 16], strides = [1, 1]} : vector<2x32xf32> to vector<2x16xf32>
    %c6_96 = arith.constant 6 : index
    %c127_97 = arith.constant 127 : index
    %101 = vector.load %arg6[%c6_96, %c127_97] : memref<12x324xf32, #tpu.memory_space<vmem>>, vector<2x16xf32>
    tpu.vector_store %arg6[%c6_96, %c127_97], %100 {strides = array<i32>} : memref<12x324xf32, #tpu.memory_space<vmem>>, vector<2x16xf32>,
    %c44 = arith.constant 44 : index
    %c0_98 = arith.constant 0 : index
    %102 = vector.load %arg5[%c44, %c0_98] : memref<96x32xf32, #tpu.memory_space<vmem>>, vector<2x32xf32>
    %103 = vector.extract_strided_slice %102 {offsets = [0, 0], sizes = [2, 16], strides = [1, 1]} : vector<2x32xf32> to vector<2x16xf32>
    %c2_99 = arith.constant 2 : index
    %c127_100 = arith.constant 127 : index
    %104 = vector.load %arg6[%c2_99, %c127_100] : memref<12x324xf32, #tpu.memory_space<vmem>>, vector<2x16xf32>
    tpu.vector_store %arg6[%c2_99, %c127_100], %103 {strides = array<i32>} : memref<12x324xf32, #tpu.memory_space<vmem>>, vector<2x16xf32>,
    %105 = vector.extract_strided_slice %102 {offsets = [0, 16], sizes = [2, 16], strides = [1, 1]} : vector<2x32xf32> to vector<2x16xf32>
    %c8_101 = arith.constant 8 : index
    %c127_102 = arith.constant 127 : index
    %106 = vector.load %arg6[%c8_101, %c127_102] : memref<12x324xf32, #tpu.memory_space<vmem>>, vector<2x16xf32>
    tpu.vector_store %arg6[%c8_101, %c127_102], %105 {strides = array<i32>} : memref<12x324xf32, #tpu.memory_space<vmem>>, vector<2x16xf32>,
    %c76 = arith.constant 76 : index
    %c0_103 = arith.constant 0 : index
    %107 = vector.load %arg5[%c76, %c0_103] : memref<96x32xf32, #tpu.memory_space<vmem>>, vector<2x32xf32>
    %108 = vector.extract_strided_slice %107 {offsets = [0, 0], sizes = [2, 16], strides = [1, 1]} : vector<2x32xf32> to vector<2x16xf32>
    %c4_104 = arith.constant 4 : index
    %c127_105 = arith.constant 127 : index
    %109 = vector.load %arg6[%c4_104, %c127_105] : memref<12x324xf32, #tpu.memory_space<vmem>>, vector<2x16xf32>
    tpu.vector_store %arg6[%c4_104, %c127_105], %108 {strides = array<i32>} : memref<12x324xf32, #tpu.memory_space<vmem>>, vector<2x16xf32>,
    %110 = vector.extract_strided_slice %107 {offsets = [0, 16], sizes = [2, 16], strides = [1, 1]} : vector<2x32xf32> to vector<2x16xf32>
    %c10_106 = arith.constant 10 : index
    %c127_107 = arith.constant 127 : index
    %111 = vector.load %arg6[%c10_106, %c127_107] : memref<12x324xf32, #tpu.memory_space<vmem>>, vector<2x16xf32>
    tpu.vector_store %arg6[%c10_106, %c127_107], %110 {strides = array<i32>} : memref<12x324xf32, #tpu.memory_space<vmem>>, vector<2x16xf32>,
    %c14 = arith.constant 14 : index
    %c0_108 = arith.constant 0 : index
    %112 = vector.load %arg5[%c14, %c0_108] : memref<96x32xf32, #tpu.memory_space<vmem>>, vector<2x32xf32>
    %113 = vector.extract_strided_slice %112 {offsets = [0, 0], sizes = [2, 16], strides = [1, 1]} : vector<2x32xf32> to vector<2x16xf32>
    %c0_109 = arith.constant 0 : index
    %c145 = arith.constant 145 : index
    %114 = vector.load %arg6[%c0_109, %c145] : memref<12x324xf32, #tpu.memory_space<vmem>>, vector<2x16xf32>
    tpu.vector_store %arg6[%c0_109, %c145], %113 {strides = array<i32>} : memref<12x324xf32, #tpu.memory_space<vmem>>, vector<2x16xf32>,
    %115 = vector.extract_strided_slice %112 {offsets = [0, 16], sizes = [2, 16], strides = [1, 1]} : vector<2x32xf32> to vector<2x16xf32>
    %c6_110 = arith.constant 6 : index
    %c145_111 = arith.constant 145 : index
    %116 = vector.load %arg6[%c6_110, %c145_111] : memref<12x324xf32, #tpu.memory_space<vmem>>, vector<2x16xf32>
    tpu.vector_store %arg6[%c6_110, %c145_111], %115 {strides = array<i32>} : memref<12x324xf32, #tpu.memory_space<vmem>>, vector<2x16xf32>,
    %c46 = arith.constant 46 : index
    %c0_112 = arith.constant 0 : index
    %117 = vector.load %arg5[%c46, %c0_112] : memref<96x32xf32, #tpu.memory_space<vmem>>, vector<2x32xf32>
    %118 = vector.extract_strided_slice %117 {offsets = [0, 0], sizes = [2, 16], strides = [1, 1]} : vector<2x32xf32> to vector<2x16xf32>
    %c2_113 = arith.constant 2 : index
    %c145_114 = arith.constant 145 : index
    %119 = vector.load %arg6[%c2_113, %c145_114] : memref<12x324xf32, #tpu.memory_space<vmem>>, vector<2x16xf32>
    tpu.vector_store %arg6[%c2_113, %c145_114], %118 {strides = array<i32>} : memref<12x324xf32, #tpu.memory_space<vmem>>, vector<2x16xf32>,
    %120 = vector.extract_strided_slice %117 {offsets = [0, 16], sizes = [2, 16], strides = [1, 1]} : vector<2x32xf32> to vector<2x16xf32>
    %c8_115 = arith.constant 8 : index
    %c145_116 = arith.constant 145 : index
    %121 = vector.load %arg6[%c8_115, %c145_116] : memref<12x324xf32, #tpu.memory_space<vmem>>, vector<2x16xf32>
    tpu.vector_store %arg6[%c8_115, %c145_116], %120 {strides = array<i32>} : memref<12x324xf32, #tpu.memory_space<vmem>>, vector<2x16xf32>,
    %c78 = arith.constant 78 : index
    %c0_117 = arith.constant 0 : index
    %122 = vector.load %arg5[%c78, %c0_117] : memref<96x32xf32, #tpu.memory_space<vmem>>, vector<2x32xf32>
    %123 = vector.extract_strided_slice %122 {offsets = [0, 0], sizes = [2, 16], strides = [1, 1]} : vector<2x32xf32> to vector<2x16xf32>
    %c4_118 = arith.constant 4 : index
    %c145_119 = arith.constant 145 : index
    %124 = vector.load %arg6[%c4_118, %c145_119] : memref<12x324xf32, #tpu.memory_space<vmem>>, vector<2x16xf32>
    tpu.vector_store %arg6[%c4_118, %c145_119], %123 {strides = array<i32>} : memref<12x324xf32, #tpu.memory_space<vmem>>, vector<2x16xf32>,
    %125 = vector.extract_strided_slice %122 {offsets = [0, 16], sizes = [2, 16], strides = [1, 1]} : vector<2x32xf32> to vector<2x16xf32>
    %c10_120 = arith.constant 10 : index
    %c145_121 = arith.constant 145 : index
    %126 = vector.load %arg6[%c10_120, %c145_121] : memref<12x324xf32, #tpu.memory_space<vmem>>, vector<2x16xf32>
    tpu.vector_store %arg6[%c10_120, %c145_121], %125 {strides = array<i32>} : memref<12x324xf32, #tpu.memory_space<vmem>>, vector<2x16xf32>,
    %c16 = arith.constant 16 : index
    %c0_122 = arith.constant 0 : index
    %127 = vector.load %arg5[%c16, %c0_122] : memref<96x32xf32, #tpu.memory_space<vmem>>, vector<2x32xf32>
    %128 = vector.extract_strided_slice %127 {offsets = [0, 0], sizes = [2, 16], strides = [1, 1]} : vector<2x32xf32> to vector<2x16xf32>
    %c0_123 = arith.constant 0 : index
    %c163 = arith.constant 163 : index
    %129 = vector.load %arg6[%c0_123, %c163] : memref<12x324xf32, #tpu.memory_space<vmem>>, vector<2x16xf32>
    tpu.vector_store %arg6[%c0_123, %c163], %128 {strides = array<i32>} : memref<12x324xf32, #tpu.memory_space<vmem>>, vector<2x16xf32>,
    %130 = vector.extract_strided_slice %127 {offsets = [0, 16], sizes = [2, 16], strides = [1, 1]} : vector<2x32xf32> to vector<2x16xf32>
    %c6_124 = arith.constant 6 : index
    %c163_125 = arith.constant 163 : index
    %131 = vector.load %arg6[%c6_124, %c163_125] : memref<12x324xf32, #tpu.memory_space<vmem>>, vector<2x16xf32>
    tpu.vector_store %arg6[%c6_124, %c163_125], %130 {strides = array<i32>} : memref<12x324xf32, #tpu.memory_space<vmem>>, vector<2x16xf32>,
    %c48 = arith.constant 48 : index
    %c0_126 = arith.constant 0 : index
    %132 = vector.load %arg5[%c48, %c0_126] : memref<96x32xf32, #tpu.memory_space<vmem>>, vector<2x32xf32>
    %133 = vector.extract_strided_slice %132 {offsets = [0, 0], sizes = [2, 16], strides = [1, 1]} : vector<2x32xf32> to vector<2x16xf32>
    %c2_127 = arith.constant 2 : index
    %c163_128 = arith.constant 163 : index
    %134 = vector.load %arg6[%c2_127, %c163_128] : memref<12x324xf32, #tpu.memory_space<vmem>>, vector<2x16xf32>
    tpu.vector_store %arg6[%c2_127, %c163_128], %133 {strides = array<i32>} : memref<12x324xf32, #tpu.memory_space<vmem>>, vector<2x16xf32>,
    %135 = vector.extract_strided_slice %132 {offsets = [0, 16], sizes = [2, 16], strides = [1, 1]} : vector<2x32xf32> to vector<2x16xf32>
    %c8_129 = arith.constant 8 : index
    %c163_130 = arith.constant 163 : index
    %136 = vector.load %arg6[%c8_129, %c163_130] : memref<12x324xf32, #tpu.memory_space<vmem>>, vector<2x16xf32>
    tpu.vector_store %arg6[%c8_129, %c163_130], %135 {strides = array<i32>} : memref<12x324xf32, #tpu.memory_space<vmem>>, vector<2x16xf32>,
    %c80 = arith.constant 80 : index
    %c0_131 = arith.constant 0 : index
    %137 = vector.load %arg5[%c80, %c0_131] : memref<96x32xf32, #tpu.memory_space<vmem>>, vector<2x32xf32>
    %138 = vector.extract_strided_slice %137 {offsets = [0, 0], sizes = [2, 16], strides = [1, 1]} : vector<2x32xf32> to vector<2x16xf32>
    %c4_132 = arith.constant 4 : index
    %c163_133 = arith.constant 163 : index
    %139 = vector.load %arg6[%c4_132, %c163_133] : memref<12x324xf32, #tpu.memory_space<vmem>>, vector<2x16xf32>
    tpu.vector_store %arg6[%c4_132, %c163_133], %138 {strides = array<i32>} : memref<12x324xf32, #tpu.memory_space<vmem>>, vector<2x16xf32>,
    %140 = vector.extract_strided_slice %137 {offsets = [0, 16], sizes = [2, 16], strides = [1, 1]} : vector<2x32xf32> to vector<2x16xf32>
    %c10_134 = arith.constant 10 : index
    %c163_135 = arith.constant 163 : index
    %141 = vector.load %arg6[%c10_134, %c163_135] : memref<12x324xf32, #tpu.memory_space<vmem>>, vector<2x16xf32>
    tpu.vector_store %arg6[%c10_134, %c163_135], %140 {strides = array<i32>} : memref<12x324xf32, #tpu.memory_space<vmem>>, vector<2x16xf32>,
    %c18 = arith.constant 18 : index
    %c0_136 = arith.constant 0 : index
    %142 = vector.load %arg5[%c18, %c0_136] : memref<96x32xf32, #tpu.memory_space<vmem>>, vector<2x32xf32>
    %143 = vector.extract_strided_slice %142 {offsets = [0, 0], sizes = [2, 16], strides = [1, 1]} : vector<2x32xf32> to vector<2x16xf32>
    %c0_137 = arith.constant 0 : index
    %c181 = arith.constant 181 : index
    %144 = vector.load %arg6[%c0_137, %c181] : memref<12x324xf32, #tpu.memory_space<vmem>>, vector<2x16xf32>
    tpu.vector_store %arg6[%c0_137, %c181], %143 {strides = array<i32>} : memref<12x324xf32, #tpu.memory_space<vmem>>, vector<2x16xf32>,
    %145 = vector.extract_strided_slice %142 {offsets = [0, 16], sizes = [2, 16], strides = [1, 1]} : vector<2x32xf32> to vector<2x16xf32>
    %c6_138 = arith.constant 6 : index
    %c181_139 = arith.constant 181 : index
    %146 = vector.load %arg6[%c6_138, %c181_139] : memref<12x324xf32, #tpu.memory_space<vmem>>, vector<2x16xf32>
    tpu.vector_store %arg6[%c6_138, %c181_139], %145 {strides = array<i32>} : memref<12x324xf32, #tpu.memory_space<vmem>>, vector<2x16xf32>,
    %c50 = arith.constant 50 : index
    %c0_140 = arith.constant 0 : index
    %147 = vector.load %arg5[%c50, %c0_140] : memref<96x32xf32, #tpu.memory_space<vmem>>, vector<2x32xf32>
    %148 = vector.extract_strided_slice %147 {offsets = [0, 0], sizes = [2, 16], strides = [1, 1]} : vector<2x32xf32> to vector<2x16xf32>
    %c2_141 = arith.constant 2 : index
    %c181_142 = arith.constant 181 : index
    %149 = vector.load %arg6[%c2_141, %c181_142] : memref<12x324xf32, #tpu.memory_space<vmem>>, vector<2x16xf32>
    tpu.vector_store %arg6[%c2_141, %c181_142], %148 {strides = array<i32>} : memref<12x324xf32, #tpu.memory_space<vmem>>, vector<2x16xf32>,
    %150 = vector.extract_strided_slice %147 {offsets = [0, 16], sizes = [2, 16], strides = [1, 1]} : vector<2x32xf32> to vector<2x16xf32>
    %c8_143 = arith.constant 8 : index
    %c181_144 = arith.constant 181 : index
    %151 = vector.load %arg6[%c8_143, %c181_144] : memref<12x324xf32, #tpu.memory_space<vmem>>, vector<2x16xf32>
    tpu.vector_store %arg6[%c8_143, %c181_144], %150 {strides = array<i32>} : memref<12x324xf32, #tpu.memory_space<vmem>>, vector<2x16xf32>,
    %c82 = arith.constant 82 : index
    %c0_145 = arith.constant 0 : index
    %152 = vector.load %arg5[%c82, %c0_145] : memref<96x32xf32, #tpu.memory_space<vmem>>, vector<2x32xf32>
    %153 = vector.extract_strided_slice %152 {offsets = [0, 0], sizes = [2, 16], strides = [1, 1]} : vector<2x32xf32> to vector<2x16xf32>
    %c4_146 = arith.constant 4 : index
    %c181_147 = arith.constant 181 : index
    %154 = vector.load %arg6[%c4_146, %c181_147] : memref<12x324xf32, #tpu.memory_space<vmem>>, vector<2x16xf32>
    tpu.vector_store %arg6[%c4_146, %c181_147], %153 {strides = array<i32>} : memref<12x324xf32, #tpu.memory_space<vmem>>, vector<2x16xf32>,
    %155 = vector.extract_strided_slice %152 {offsets = [0, 16], sizes = [2, 16], strides = [1, 1]} : vector<2x32xf32> to vector<2x16xf32>
    %c10_148 = arith.constant 10 : index
    %c181_149 = arith.constant 181 : index
    %156 = vector.load %arg6[%c10_148, %c181_149] : memref<12x324xf32, #tpu.memory_space<vmem>>, vector<2x16xf32>
    tpu.vector_store %arg6[%c10_148, %c181_149], %155 {strides = array<i32>} : memref<12x324xf32, #tpu.memory_space<vmem>>, vector<2x16xf32>,
    %c20 = arith.constant 20 : index
    %c0_150 = arith.constant 0 : index
    %157 = vector.load %arg5[%c20, %c0_150] : memref<96x32xf32, #tpu.memory_space<vmem>>, vector<2x32xf32>
    %158 = vector.extract_strided_slice %157 {offsets = [0, 0], sizes = [2, 16], strides = [1, 1]} : vector<2x32xf32> to vector<2x16xf32>
    %c0_151 = arith.constant 0 : index
    %c199 = arith.constant 199 : index
    %159 = vector.load %arg6[%c0_151, %c199] : memref<12x324xf32, #tpu.memory_space<vmem>>, vector<2x16xf32>
    tpu.vector_store %arg6[%c0_151, %c199], %158 {strides = array<i32>} : memref<12x324xf32, #tpu.memory_space<vmem>>, vector<2x16xf32>,
    %160 = vector.extract_strided_slice %157 {offsets = [0, 16], sizes = [2, 16], strides = [1, 1]} : vector<2x32xf32> to vector<2x16xf32>
    %c6_152 = arith.constant 6 : index
    %c199_153 = arith.constant 199 : index
    %161 = vector.load %arg6[%c6_152, %c199_153] : memref<12x324xf32, #tpu.memory_space<vmem>>, vector<2x16xf32>
    tpu.vector_store %arg6[%c6_152, %c199_153], %160 {strides = array<i32>} : memref<12x324xf32, #tpu.memory_space<vmem>>, vector<2x16xf32>,
    %c52 = arith.constant 52 : index
    %c0_154 = arith.constant 0 : index
    %162 = vector.load %arg5[%c52, %c0_154] : memref<96x32xf32, #tpu.memory_space<vmem>>, vector<2x32xf32>
    %163 = vector.extract_strided_slice %162 {offsets = [0, 0], sizes = [2, 16], strides = [1, 1]} : vector<2x32xf32> to vector<2x16xf32>
    %c2_155 = arith.constant 2 : index
    %c199_156 = arith.constant 199 : index
    %164 = vector.load %arg6[%c2_155, %c199_156] : memref<12x324xf32, #tpu.memory_space<vmem>>, vector<2x16xf32>
    tpu.vector_store %arg6[%c2_155, %c199_156], %163 {strides = array<i32>} : memref<12x324xf32, #tpu.memory_space<vmem>>, vector<2x16xf32>,
    %165 = vector.extract_strided_slice %162 {offsets = [0, 16], sizes = [2, 16], strides = [1, 1]} : vector<2x32xf32> to vector<2x16xf32>
    %c8_157 = arith.constant 8 : index
    %c199_158 = arith.constant 199 : index
    %166 = vector.load %arg6[%c8_157, %c199_158] : memref<12x324xf32, #tpu.memory_space<vmem>>, vector<2x16xf32>
    tpu.vector_store %arg6[%c8_157, %c199_158], %165 {strides = array<i32>} : memref<12x324xf32, #tpu.memory_space<vmem>>, vector<2x16xf32>,
    %c84 = arith.constant 84 : index
    %c0_159 = arith.constant 0 : index
    %167 = vector.load %arg5[%c84, %c0_159] : memref<96x32xf32, #tpu.memory_space<vmem>>, vector<2x32xf32>
    %168 = vector.extract_strided_slice %167 {offsets = [0, 0], sizes = [2, 16], strides = [1, 1]} : vector<2x32xf32> to vector<2x16xf32>
    %c4_160 = arith.constant 4 : index
    %c199_161 = arith.constant 199 : index
    %169 = vector.load %arg6[%c4_160, %c199_161] : memref<12x324xf32, #tpu.memory_space<vmem>>, vector<2x16xf32>
    tpu.vector_store %arg6[%c4_160, %c199_161], %168 {strides = array<i32>} : memref<12x324xf32, #tpu.memory_space<vmem>>, vector<2x16xf32>,
    %170 = vector.extract_strided_slice %167 {offsets = [0, 16], sizes = [2, 16], strides = [1, 1]} : vector<2x32xf32> to vector<2x16xf32>
    %c10_162 = arith.constant 10 : index
    %c199_163 = arith.constant 199 : index
    %171 = vector.load %arg6[%c10_162, %c199_163] : memref<12x324xf32, #tpu.memory_space<vmem>>, vector<2x16xf32>
    tpu.vector_store %arg6[%c10_162, %c199_163], %170 {strides = array<i32>} : memref<12x324xf32, #tpu.memory_space<vmem>>, vector<2x16xf32>,
    %c22 = arith.constant 22 : index
    %c0_164 = arith.constant 0 : index
    %172 = vector.load %arg5[%c22, %c0_164] : memref<96x32xf32, #tpu.memory_space<vmem>>, vector<2x32xf32>
    %173 = vector.extract_strided_slice %172 {offsets = [0, 0], sizes = [2, 16], strides = [1, 1]} : vector<2x32xf32> to vector<2x16xf32>
    %c0_165 = arith.constant 0 : index
    %c217 = arith.constant 217 : index
    %174 = vector.load %arg6[%c0_165, %c217] : memref<12x324xf32, #tpu.memory_space<vmem>>, vector<2x16xf32>
    tpu.vector_store %arg6[%c0_165, %c217], %173 {strides = array<i32>} : memref<12x324xf32, #tpu.memory_space<vmem>>, vector<2x16xf32>,
    %175 = vector.extract_strided_slice %172 {offsets = [0, 16], sizes = [2, 16], strides = [1, 1]} : vector<2x32xf32> to vector<2x16xf32>
    %c6_166 = arith.constant 6 : index
    %c217_167 = arith.constant 217 : index
    %176 = vector.load %arg6[%c6_166, %c217_167] : memref<12x324xf32, #tpu.memory_space<vmem>>, vector<2x16xf32>
    tpu.vector_store %arg6[%c6_166, %c217_167], %175 {strides = array<i32>} : memref<12x324xf32, #tpu.memory_space<vmem>>, vector<2x16xf32>,
    %c54 = arith.constant 54 : index
    %c0_168 = arith.constant 0 : index
    %177 = vector.load %arg5[%c54, %c0_168] : memref<96x32xf32, #tpu.memory_space<vmem>>, vector<2x32xf32>
    %178 = vector.extract_strided_slice %177 {offsets = [0, 0], sizes = [2, 16], strides = [1, 1]} : vector<2x32xf32> to vector<2x16xf32>
    %c2_169 = arith.constant 2 : index
    %c217_170 = arith.constant 217 : index
    %179 = vector.load %arg6[%c2_169, %c217_170] : memref<12x324xf32, #tpu.memory_space<vmem>>, vector<2x16xf32>
    tpu.vector_store %arg6[%c2_169, %c217_170], %178 {strides = array<i32>} : memref<12x324xf32, #tpu.memory_space<vmem>>, vector<2x16xf32>,
    %180 = vector.extract_strided_slice %177 {offsets = [0, 16], sizes = [2, 16], strides = [1, 1]} : vector<2x32xf32> to vector<2x16xf32>
    %c8_171 = arith.constant 8 : index
    %c217_172 = arith.constant 217 : index
    %181 = vector.load %arg6[%c8_171, %c217_172] : memref<12x324xf32, #tpu.memory_space<vmem>>, vector<2x16xf32>
    tpu.vector_store %arg6[%c8_171, %c217_172], %180 {strides = array<i32>} : memref<12x324xf32, #tpu.memory_space<vmem>>, vector<2x16xf32>,
    %c86 = arith.constant 86 : index
    %c0_173 = arith.constant 0 : index
    %182 = vector.load %arg5[%c86, %c0_173] : memref<96x32xf32, #tpu.memory_space<vmem>>, vector<2x32xf32>
    %183 = vector.extract_strided_slice %182 {offsets = [0, 0], sizes = [2, 16], strides = [1, 1]} : vector<2x32xf32> to vector<2x16xf32>
    %c4_174 = arith.constant 4 : index
    %c217_175 = arith.constant 217 : index
    %184 = vector.load %arg6[%c4_174, %c217_175] : memref<12x324xf32, #tpu.memory_space<vmem>>, vector<2x16xf32>
    tpu.vector_store %arg6[%c4_174, %c217_175], %183 {strides = array<i32>} : memref<12x324xf32, #tpu.memory_space<vmem>>, vector<2x16xf32>,
    %185 = vector.extract_strided_slice %182 {offsets = [0, 16], sizes = [2, 16], strides = [1, 1]} : vector<2x32xf32> to vector<2x16xf32>
    %c10_176 = arith.constant 10 : index
    %c217_177 = arith.constant 217 : index
    %186 = vector.load %arg6[%c10_176, %c217_177] : memref<12x324xf32, #tpu.memory_space<vmem>>, vector<2x16xf32>
    tpu.vector_store %arg6[%c10_176, %c217_177], %185 {strides = array<i32>} : memref<12x324xf32, #tpu.memory_space<vmem>>, vector<2x16xf32>,
    %c24 = arith.constant 24 : index
    %c0_178 = arith.constant 0 : index
    %187 = vector.load %arg5[%c24, %c0_178] : memref<96x32xf32, #tpu.memory_space<vmem>>, vector<2x32xf32>
    %188 = vector.extract_strided_slice %187 {offsets = [0, 0], sizes = [2, 16], strides = [1, 1]} : vector<2x32xf32> to vector<2x16xf32>
    %c0_179 = arith.constant 0 : index
    %c235 = arith.constant 235 : index
    %189 = vector.load %arg6[%c0_179, %c235] : memref<12x324xf32, #tpu.memory_space<vmem>>, vector<2x16xf32>
    tpu.vector_store %arg6[%c0_179, %c235], %188 {strides = array<i32>} : memref<12x324xf32, #tpu.memory_space<vmem>>, vector<2x16xf32>,
    %190 = vector.extract_strided_slice %187 {offsets = [0, 16], sizes = [2, 16], strides = [1, 1]} : vector<2x32xf32> to vector<2x16xf32>
    %c6_180 = arith.constant 6 : index
    %c235_181 = arith.constant 235 : index
    %191 = vector.load %arg6[%c6_180, %c235_181] : memref<12x324xf32, #tpu.memory_space<vmem>>, vector<2x16xf32>
    tpu.vector_store %arg6[%c6_180, %c235_181], %190 {strides = array<i32>} : memref<12x324xf32, #tpu.memory_space<vmem>>, vector<2x16xf32>,
    %c56 = arith.constant 56 : index
    %c0_182 = arith.constant 0 : index
    %192 = vector.load %arg5[%c56, %c0_182] : memref<96x32xf32, #tpu.memory_space<vmem>>, vector<2x32xf32>
    %193 = vector.extract_strided_slice %192 {offsets = [0, 0], sizes = [2, 16], strides = [1, 1]} : vector<2x32xf32> to vector<2x16xf32>
    %c2_183 = arith.constant 2 : index
    %c235_184 = arith.constant 235 : index
    %194 = vector.load %arg6[%c2_183, %c235_184] : memref<12x324xf32, #tpu.memory_space<vmem>>, vector<2x16xf32>
    tpu.vector_store %arg6[%c2_183, %c235_184], %193 {strides = array<i32>} : memref<12x324xf32, #tpu.memory_space<vmem>>, vector<2x16xf32>,
    %195 = vector.extract_strided_slice %192 {offsets = [0, 16], sizes = [2, 16], strides = [1, 1]} : vector<2x32xf32> to vector<2x16xf32>
    %c8_185 = arith.constant 8 : index
    %c235_186 = arith.constant 235 : index
    %196 = vector.load %arg6[%c8_185, %c235_186] : memref<12x324xf32, #tpu.memory_space<vmem>>, vector<2x16xf32>
    tpu.vector_store %arg6[%c8_185, %c235_186], %195 {strides = array<i32>} : memref<12x324xf32, #tpu.memory_space<vmem>>, vector<2x16xf32>,
    %c88 = arith.constant 88 : index
    %c0_187 = arith.constant 0 : index
    %197 = vector.load %arg5[%c88, %c0_187] : memref<96x32xf32, #tpu.memory_space<vmem>>, vector<2x32xf32>
    %198 = vector.extract_strided_slice %197 {offsets = [0, 0], sizes = [2, 16], strides = [1, 1]} : vector<2x32xf32> to vector<2x16xf32>
    %c4_188 = arith.constant 4 : index
    %c235_189 = arith.constant 235 : index
    %199 = vector.load %arg6[%c4_188, %c235_189] : memref<12x324xf32, #tpu.memory_space<vmem>>, vector<2x16xf32>
    tpu.vector_store %arg6[%c4_188, %c235_189], %198 {strides = array<i32>} : memref<12x324xf32, #tpu.memory_space<vmem>>, vector<2x16xf32>,
    %200 = vector.extract_strided_slice %197 {offsets = [0, 16], sizes = [2, 16], strides = [1, 1]} : vector<2x32xf32> to vector<2x16xf32>
    %c10_190 = arith.constant 10 : index
    %c235_191 = arith.constant 235 : index
    %201 = vector.load %arg6[%c10_190, %c235_191] : memref<12x324xf32, #tpu.memory_space<vmem>>, vector<2x16xf32>
    tpu.vector_store %arg6[%c10_190, %c235_191], %200 {strides = array<i32>} : memref<12x324xf32, #tpu.memory_space<vmem>>, vector<2x16xf32>,
    %c26 = arith.constant 26 : index
    %c0_192 = arith.constant 0 : index
    %202 = vector.load %arg5[%c26, %c0_192] : memref<96x32xf32, #tpu.memory_space<vmem>>, vector<2x32xf32>
    %203 = vector.extract_strided_slice %202 {offsets = [0, 0], sizes = [2, 16], strides = [1, 1]} : vector<2x32xf32> to vector<2x16xf32>
    %c0_193 = arith.constant 0 : index
    %c253 = arith.constant 253 : index
    %204 = vector.load %arg6[%c0_193, %c253] : memref<12x324xf32, #tpu.memory_space<vmem>>, vector<2x16xf32>
    tpu.vector_store %arg6[%c0_193, %c253], %203 {strides = array<i32>} : memref<12x324xf32, #tpu.memory_space<vmem>>, vector<2x16xf32>,
    %205 = vector.extract_strided_slice %202 {offsets = [0, 16], sizes = [2, 16], strides = [1, 1]} : vector<2x32xf32> to vector<2x16xf32>
    %c6_194 = arith.constant 6 : index
    %c253_195 = arith.constant 253 : index
    %206 = vector.load %arg6[%c6_194, %c253_195] : memref<12x324xf32, #tpu.memory_space<vmem>>, vector<2x16xf32>
    tpu.vector_store %arg6[%c6_194, %c253_195], %205 {strides = array<i32>} : memref<12x324xf32, #tpu.memory_space<vmem>>, vector<2x16xf32>,
    %c58 = arith.constant 58 : index
    %c0_196 = arith.constant 0 : index
    %207 = vector.load %arg5[%c58, %c0_196] : memref<96x32xf32, #tpu.memory_space<vmem>>, vector<2x32xf32>
    %208 = vector.extract_strided_slice %207 {offsets = [0, 0], sizes = [2, 16], strides = [1, 1]} : vector<2x32xf32> to vector<2x16xf32>
    %c2_197 = arith.constant 2 : index
    %c253_198 = arith.constant 253 : index
    %209 = vector.load %arg6[%c2_197, %c253_198] : memref<12x324xf32, #tpu.memory_space<vmem>>, vector<2x16xf32>
    tpu.vector_store %arg6[%c2_197, %c253_198], %208 {strides = array<i32>} : memref<12x324xf32, #tpu.memory_space<vmem>>, vector<2x16xf32>,
    %210 = vector.extract_strided_slice %207 {offsets = [0, 16], sizes = [2, 16], strides = [1, 1]} : vector<2x32xf32> to vector<2x16xf32>
    %c8_199 = arith.constant 8 : index
    %c253_200 = arith.constant 253 : index
    %211 = vector.load %arg6[%c8_199, %c253_200] : memref<12x324xf32, #tpu.memory_space<vmem>>, vector<2x16xf32>
    tpu.vector_store %arg6[%c8_199, %c253_200], %210 {strides = array<i32>} : memref<12x324xf32, #tpu.memory_space<vmem>>, vector<2x16xf32>,
    %c90 = arith.constant 90 : index
    %c0_201 = arith.constant 0 : index
    %212 = vector.load %arg5[%c90, %c0_201] : memref<96x32xf32, #tpu.memory_space<vmem>>, vector<2x32xf32>
    %213 = vector.extract_strided_slice %212 {offsets = [0, 0], sizes = [2, 16], strides = [1, 1]} : vector<2x32xf32> to vector<2x16xf32>
    %c4_202 = arith.constant 4 : index
    %c253_203 = arith.constant 253 : index
    %214 = vector.load %arg6[%c4_202, %c253_203] : memref<12x324xf32, #tpu.memory_space<vmem>>, vector<2x16xf32>
    tpu.vector_store %arg6[%c4_202, %c253_203], %213 {strides = array<i32>} : memref<12x324xf32, #tpu.memory_space<vmem>>, vector<2x16xf32>,
    %215 = vector.extract_strided_slice %212 {offsets = [0, 16], sizes = [2, 16], strides = [1, 1]} : vector<2x32xf32> to vector<2x16xf32>
    %c10_204 = arith.constant 10 : index
    %c253_205 = arith.constant 253 : index
    %216 = vector.load %arg6[%c10_204, %c253_205] : memref<12x324xf32, #tpu.memory_space<vmem>>, vector<2x16xf32>
    tpu.vector_store %arg6[%c10_204, %c253_205], %215 {strides = array<i32>} : memref<12x324xf32, #tpu.memory_space<vmem>>, vector<2x16xf32>,
    %c28 = arith.constant 28 : index
    %c0_206 = arith.constant 0 : index
    %217 = vector.load %arg5[%c28, %c0_206] : memref<96x32xf32, #tpu.memory_space<vmem>>, vector<2x32xf32>
    %218 = vector.extract_strided_slice %217 {offsets = [0, 0], sizes = [2, 16], strides = [1, 1]} : vector<2x32xf32> to vector<2x16xf32>
    %c0_207 = arith.constant 0 : index
    %c271 = arith.constant 271 : index
    %219 = vector.load %arg6[%c0_207, %c271] : memref<12x324xf32, #tpu.memory_space<vmem>>, vector<2x16xf32>
    tpu.vector_store %arg6[%c0_207, %c271], %218 {strides = array<i32>} : memref<12x324xf32, #tpu.memory_space<vmem>>, vector<2x16xf32>,
    %220 = vector.extract_strided_slice %217 {offsets = [0, 16], sizes = [2, 16], strides = [1, 1]} : vector<2x32xf32> to vector<2x16xf32>
    %c6_208 = arith.constant 6 : index
    %c271_209 = arith.constant 271 : index
    %221 = vector.load %arg6[%c6_208, %c271_209] : memref<12x324xf32, #tpu.memory_space<vmem>>, vector<2x16xf32>
    tpu.vector_store %arg6[%c6_208, %c271_209], %220 {strides = array<i32>} : memref<12x324xf32, #tpu.memory_space<vmem>>, vector<2x16xf32>,
    %c60 = arith.constant 60 : index
    %c0_210 = arith.constant 0 : index
    %222 = vector.load %arg5[%c60, %c0_210] : memref<96x32xf32, #tpu.memory_space<vmem>>, vector<2x32xf32>
    %223 = vector.extract_strided_slice %222 {offsets = [0, 0], sizes = [2, 16], strides = [1, 1]} : vector<2x32xf32> to vector<2x16xf32>
    %c2_211 = arith.constant 2 : index
    %c271_212 = arith.constant 271 : index
    %224 = vector.load %arg6[%c2_211, %c271_212] : memref<12x324xf32, #tpu.memory_space<vmem>>, vector<2x16xf32>
    tpu.vector_store %arg6[%c2_211, %c271_212], %223 {strides = array<i32>} : memref<12x324xf32, #tpu.memory_space<vmem>>, vector<2x16xf32>,
    %225 = vector.extract_strided_slice %222 {offsets = [0, 16], sizes = [2, 16], strides = [1, 1]} : vector<2x32xf32> to vector<2x16xf32>
    %c8_213 = arith.constant 8 : index
    %c271_214 = arith.constant 271 : index
    %226 = vector.load %arg6[%c8_213, %c271_214] : memref<12x324xf32, #tpu.memory_space<vmem>>, vector<2x16xf32>
    tpu.vector_store %arg6[%c8_213, %c271_214], %225 {strides = array<i32>} : memref<12x324xf32, #tpu.memory_space<vmem>>, vector<2x16xf32>,
    %c92 = arith.constant 92 : index
    %c0_215 = arith.constant 0 : index
    %227 = vector.load %arg5[%c92, %c0_215] : memref<96x32xf32, #tpu.memory_space<vmem>>, vector<2x32xf32>
    %228 = vector.extract_strided_slice %227 {offsets = [0, 0], sizes = [2, 16], strides = [1, 1]} : vector<2x32xf32> to vector<2x16xf32>
    %c4_216 = arith.constant 4 : index
    %c271_217 = arith.constant 271 : index
    %229 = vector.load %arg6[%c4_216, %c271_217] : memref<12x324xf32, #tpu.memory_space<vmem>>, vector<2x16xf32>
    tpu.vector_store %arg6[%c4_216, %c271_217], %228 {strides = array<i32>} : memref<12x324xf32, #tpu.memory_space<vmem>>, vector<2x16xf32>,
    %230 = vector.extract_strided_slice %227 {offsets = [0, 16], sizes = [2, 16], strides = [1, 1]} : vector<2x32xf32> to vector<2x16xf32>
    %c10_218 = arith.constant 10 : index
    %c271_219 = arith.constant 271 : index
    %231 = vector.load %arg6[%c10_218, %c271_219] : memref<12x324xf32, #tpu.memory_space<vmem>>, vector<2x16xf32>
    tpu.vector_store %arg6[%c10_218, %c271_219], %230 {strides = array<i32>} : memref<12x324xf32, #tpu.memory_space<vmem>>, vector<2x16xf32>,
    %c30 = arith.constant 30 : index
    %c0_220 = arith.constant 0 : index
    %232 = vector.load %arg5[%c30, %c0_220] : memref<96x32xf32, #tpu.memory_space<vmem>>, vector<2x32xf32>
    %233 = vector.extract_strided_slice %232 {offsets = [0, 0], sizes = [2, 16], strides = [1, 1]} : vector<2x32xf32> to vector<2x16xf32>
    %c0_221 = arith.constant 0 : index
    %c289 = arith.constant 289 : index
    %234 = vector.load %arg6[%c0_221, %c289] : memref<12x324xf32, #tpu.memory_space<vmem>>, vector<2x16xf32>
    tpu.vector_store %arg6[%c0_221, %c289], %233 {strides = array<i32>} : memref<12x324xf32, #tpu.memory_space<vmem>>, vector<2x16xf32>,
    %235 = vector.extract_strided_slice %232 {offsets = [0, 16], sizes = [2, 16], strides = [1, 1]} : vector<2x32xf32> to vector<2x16xf32>
    %c6_222 = arith.constant 6 : index
    %c289_223 = arith.constant 289 : index
    %236 = vector.load %arg6[%c6_222, %c289_223] : memref<12x324xf32, #tpu.memory_space<vmem>>, vector<2x16xf32>
    tpu.vector_store %arg6[%c6_222, %c289_223], %235 {strides = array<i32>} : memref<12x324xf32, #tpu.memory_space<vmem>>, vector<2x16xf32>,
    %c62 = arith.constant 62 : index
    %c0_224 = arith.constant 0 : index
    %237 = vector.load %arg5[%c62, %c0_224] : memref<96x32xf32, #tpu.memory_space<vmem>>, vector<2x32xf32>
    %238 = vector.extract_strided_slice %237 {offsets = [0, 0], sizes = [2, 16], strides = [1, 1]} : vector<2x32xf32> to vector<2x16xf32>
    %c2_225 = arith.constant 2 : index
    %c289_226 = arith.constant 289 : index
    %239 = vector.load %arg6[%c2_225, %c289_226] : memref<12x324xf32, #tpu.memory_space<vmem>>, vector<2x16xf32>
    tpu.vector_store %arg6[%c2_225, %c289_226], %238 {strides = array<i32>} : memref<12x324xf32, #tpu.memory_space<vmem>>, vector<2x16xf32>,
    %240 = vector.extract_strided_slice %237 {offsets = [0, 16], sizes = [2, 16], strides = [1, 1]} : vector<2x32xf32> to vector<2x16xf32>
    %c8_227 = arith.constant 8 : index
    %c289_228 = arith.constant 289 : index
    %241 = vector.load %arg6[%c8_227, %c289_228] : memref<12x324xf32, #tpu.memory_space<vmem>>, vector<2x16xf32>
    tpu.vector_store %arg6[%c8_227, %c289_228], %240 {strides = array<i32>} : memref<12x324xf32, #tpu.memory_space<vmem>>, vector<2x16xf32>,
    %c94 = arith.constant 94 : index
    %c0_229 = arith.constant 0 : index
    %242 = vector.load %arg5[%c94, %c0_229] : memref<96x32xf32, #tpu.memory_space<vmem>>, vector<2x32xf32>
    %243 = vector.extract_strided_slice %242 {offsets = [0, 0], sizes = [2, 16], strides = [1, 1]} : vector<2x32xf32> to vector<2x16xf32>
    %c4_230 = arith.constant 4 : index
    %c289_231 = arith.constant 289 : index
    %244 = vector.load %arg6[%c4_230, %c289_231] : memref<12x324xf32, #tpu.memory_space<vmem>>, vector<2x16xf32>
    tpu.vector_store %arg6[%c4_230, %c289_231], %243 {strides = array<i32>} : memref<12x324xf32, #tpu.memory_space<vmem>>, vector<2x16xf32>,
    %245 = vector.extract_strided_slice %242 {offsets = [0, 16], sizes = [2, 16], strides = [1, 1]} : vector<2x32xf32> to vector<2x16xf32>
    %c10_232 = arith.constant 10 : index
    %c289_233 = arith.constant 289 : index
    %246 = vector.load %arg6[%c10_232, %c289_233] : memref<12x324xf32, #tpu.memory_space<vmem>>, vector<2x16xf32>
    tpu.vector_store %arg6[%c10_232, %c289_233], %245 {strides = array<i32>} : memref<12x324xf32, #tpu.memory_space<vmem>>, vector<2x16xf32>,
    %c0_234 = arith.constant 0 : index
    %c0_235 = arith.constant 0 : index
    %247 = vector.load %arg3[%c0_234, %c0_235] : memref<32x12xf32, #tpu.memory_space<vmem>>, vector<32x12xf32>
    %c0_236 = arith.constant 0 : index
    %c0_237 = arith.constant 0 : index
    %248 = vector.load %arg6[%c0_236, %c0_237] : memref<12x324xf32, #tpu.memory_space<vmem>>, vector<12x324xf32>
    %cst_238 = arith.constant dense<0.000000e+00> : vector<32x324xf32>
    %249 = tpu.matmul %247, %248, %cst_238 {dimension_numbers = #tpu.dot_dimension_numbers<[1], [0], [0], [1], [0, 0, 1, 1], [], []>} : vector<32x12xf32>, vector<12x324xf32>, vector<32x324xf32> -> vector<32x324xf32>
    %c0_239 = arith.constant 0 : index
    %c0_240 = arith.constant 0 : index
    %c0_241 = arith.constant 0 : index
    %250 = vector.load %arg4[%c0_239, %c0_240, %c0_241] : memref<1x32x324xf32, #tpu.memory_space<vmem>>, vector<1x32x324xf32>
    %251 = vector.shape_cast %250 : vector<1x32x324xf32> to vector<32x324xf32>
    %252 = vector.shape_cast %249 : vector<32x324xf32> to vector<1x32x324xf32>
    tpu.vector_store %arg4[%c0_239, %c0_240, %c0_241], %252 {strides = array<i32>} : memref<1x32x324xf32, #tpu.memory_space<vmem>>, vector<1x32x324xf32>,
    return
  }
  func.func @transform_0(%arg0: i32) -> (i32, i32, i32) {
    %c0_i32 = arith.constant 0 : i32
    %c0_i32_0 = arith.constant 0 : i32
    %c0_i32_1 = arith.constant 0 : i32
    return %arg0, %c0_i32, %c0_i32_0 : i32, i32, i32
  }
  func.func @transform_1(%arg0: i32) -> (i32, i32) {
    %c0_i32 = arith.constant 0 : i32
    %c0_i32_0 = arith.constant 0 : i32
    %c0_i32_1 = arith.constant 0 : i32
    return %c0_i32, %c0_i32_0 : i32, i32
  }
  func.func @transform_2(%arg0: i32) -> (i32, i32) {
    %c0_i32 = arith.constant 0 : i32
    %c0_i32_0 = arith.constant 0 : i32
    %c0_i32_1 = arith.constant 0 : i32
    return %c0_i32, %c0_i32_0 : i32, i32
  }
  func.func @transform_3(%arg0: i32) -> (i32, i32, i32) {
    %c0_i32 = arith.constant 0 : i32
    %c0_i32_0 = arith.constant 0 : i32
    %c0_i32_1 = arith.constant 0 : i32
    return %arg0, %c0_i32, %c0_i32_0 : i32, i32, i32
  }
}

</mosaic_0001>

<llo_original>
// kernel: conv1_forward.1
$region0: #{conv1_forward.1}
  #allocation0 [shape = 'u32[]', space=smem, size = 0x4, offset = 0x4, fixed_abs, tag = 'smem constant byte address 0x4 - core index']
  #allocation1 [shape = 'u32[72,128]{1,0:T(1,128)}', space=vmem, size = 0x9000, scoped, tag = 'internal scratch']
  #allocation2 [shape = 'f32[96,32]{1,0:T(8,128)}', space=vmem, size = 0xc000, scoped, tag = 'scratch operand']
  #allocation3 [shape = 'f32[12,324]{1,0:T(8,128)}', space=vmem, size = 0x6000, scoped, tag = 'scratch operand']
  %s0 = inlined_call_operand.hbm [shape: f32[2,96,32], index: 0, kind: input, shape index: {}]
  %s1 = inlined_call_operand.vmem [shape: f32[32,32], index: 1, kind: input, shape index: {}]
  %s2 = inlined_call_operand.vmem [shape: f32[32,12], index: 2, kind: input, shape index: {}]
  %s3 = inlined_call_operand.vmem [shape: f32[2,32,324], index: 3, kind: output, shape index: {}]
  %s4 = sld [smem:[#allocation0]]
  $region49: #{conv1_forward.1} parent=0
    _
  %s6 = ssub.s32 1, %s4
  %s7 = scalar_select 0, %s6, %s4
  $region1: #{conv1_forward.1} parent=0
    #allocation4 [shape = 'u8[98304]{0}', space=vmem, size = 0x18000, scoped, tag = 'input window, operand 0']
    #allocation5 [shape = 's32[2]{0}', space=sflag, size = 0x8, scoped, tag = 'scoped memory for conv1_forward.1']
    %8 = vsyncpa [#allocation5], 0
    %s9 = scalar_lea.sflag [#allocation5], 1
    %10 = vsyncpa %s9, 0
    loop: start=0, step=1, limit=4
    $region2: #{conv1_forward.1} parent=1 // loop_pre_header
      _
    $region3: #{conv1_forward.1} parent=1 // loop_header
      %s12 = sphi 0, %s16
      %p13 = scmp.ge.s32.totalorder %s12, 4
      %s22 = sphi 0, %s24
      %s25 = sphi 0, %s22
      %s26 = sphi 0, %s25
      %s42 = sphi 0, %s26
      %s46 = sphi 0, %s46
      %s48 = sphi 0, %s46
      %s49 = sphi 0, %s48
      %s63 = sphi 0, %s49
      %s67 = sphi 0, %s67
      %s69 = sphi 0, %s67
      %s70 = sphi 0, %s69
      %s84 = sphi 0, %s70
      %s90 = sphi 0, %s92
      %s93 = sphi 0, %s90
      %s94 = sphi 0, %s93
      %s110 = sphi 0, %s94
    $region4: #{conv1_forward.1} parent=1 // loop_header_branch
      %15 = sbr.rel (%p13) target = $region8
    $region5: #{conv1_forward.1} parent=1 // loop_body
      %s17 = ssub.s32 %s12, 1
      %s18 = ssub.s32 %s12, 2
      %s19 = sadd.s32 %s12, 1
      %s20 = ssub.s32 %s12, %s19
      %p21 = scmp.eq.s32.totalorder %s20, 0
      %s23 = sadd.s32 %s22, 1
      %s24 = scalar_select %p21, %s22, %s23
      %p27 = pneg %p21
      %p28 = scmp.eq.s32.totalorder %s12, 1
      %p29 = por %p27, %p28
      %p30 = scmp.ne.s32.totalorder %s22, %s25
      %p31 = scmp.eq.s32.totalorder %s12, 0
      %p32 = por %p30, %p31
      %p33 = scmp.ne.s32.totalorder %s22, %s25
      %p34 = scmp.eq.s32.totalorder %s17, 1
      %p35 = por %p33, %p34
      %p36 = scmp.ne.s32.totalorder %s25, %s26
      %p37 = scmp.eq.s32.totalorder %s17, 0
      %p38 = por %p36, %p37
      %p39 = scmp.ne.s32.totalorder %s25, %s26
      %p40 = scmp.eq.s32.totalorder %s18, 1
      %p41 = por %p39, %p40
      %p43 = scmp.ne.s32.totalorder %s26, %s42
      %p44 = scmp.eq.s32.totalorder %s18, 0
      %p45 = por %p43, %p44
      %s47 = sadd.s32 %s46, 1
      %p50 = scmp.eq.s32.totalorder %s12, 1
      %p51 = scmp.ne.s32.totalorder %s46, %s48
      %p52 = scmp.eq.s32.totalorder %s12, 0
      %p53 = por %p51, %p52
      %p54 = scmp.ne.s32.totalorder %s46, %s48
      %p55 = scmp.eq.s32.totalorder %s17, 1
      %p56 = por %p54, %p55
      %p57 = scmp.ne.s32.totalorder %s48, %s49
      %p58 = scmp.eq.s32.totalorder %s17, 0
      %p59 = por %p57, %p58
      %p60 = scmp.ne.s32.totalorder %s48, %s49
      %p61 = scmp.eq.s32.totalorder %s18, 1
      %p62 = por %p60, %p61
      %p64 = scmp.ne.s32.totalorder %s49, %s63
      %p65 = scmp.eq.s32.totalorder %s18, 0
      %p66 = por %p64, %p65
      %s68 = sadd.s32 %s67, 1
      %p71 = scmp.eq.s32.totalorder %s12, 1
      %p72 = scmp.ne.s32.totalorder %s67, %s69
      %p73 = scmp.eq.s32.totalorder %s12, 0
      %p74 = por %p72, %p73
      %p75 = scmp.ne.s32.totalorder %s67, %s69
      %p76 = scmp.eq.s32.totalorder %s17, 1
      %p77 = por %p75, %p76
      %p78 = scmp.ne.s32.totalorder %s69, %s70
      %p79 = scmp.eq.s32.totalorder %s17, 0
      %p80 = por %p78, %p79
      %p81 = scmp.ne.s32.totalorder %s69, %s70
      %p82 = scmp.eq.s32.totalorder %s18, 1
      %p83 = por %p81, %p82
      %p85 = scmp.ne.s32.totalorder %s70, %s84
      %p86 = scmp.eq.s32.totalorder %s18, 0
      %p87 = por %p85, %p86
      %s88 = ssub.s32 %s12, %s19
      %p89 = scmp.eq.s32.totalorder %s88, 0
      %s91 = sadd.s32 %s90, 1
      %s92 = scalar_select %p89, %s90, %s91
      %p95 = pneg %p89
      %p96 = scmp.eq.s32.totalorder %s12, 1
      %p97 = por %p95, %p96
      %p98 = scmp.ne.s32.totalorder %s90, %s93
      %p99 = scmp.eq.s32.totalorder %s12, 0
      %p100 = por %p98, %p99
      %p101 = scmp.ne.s32.totalorder %s90, %s93
      %p102 = scmp.eq.s32.totalorder %s17, 1
      %p103 = por %p101, %p102
      %p104 = scmp.ne.s32.totalorder %s93, %s94
      %p105 = scmp.eq.s32.totalorder %s17, 0
      %p106 = por %p104, %p105
      %p107 = scmp.ne.s32.totalorder %s93, %s94
      %p108 = scmp.eq.s32.totalorder %s18, 1
      %p109 = por %p107, %p108
      %p111 = scmp.ne.s32.totalorder %s94, %s110
      %p112 = scmp.eq.s32.totalorder %s18, 0
      %p113 = por %p111, %p112
      %p114 = scmp.le.s32.totalorder 1, %s12
      %p115 = scmp.lt.s32.totalorder %s12, 3
      %p116 = pnand %p114, %p115
      %p117 = pneg %p116
      // Predicated region
      $region9: #{conv1_forward.1} parent=5 // pred_check
        _
      $region10: #{conv1_forward.1} parent=5 // pred_check_branch
        %119 = sbr.rel (%p116) target = $region12
      $region11: #{conv1_forward.1} parent=5 // pred_region
        %s120 = ssub.s32 %s12, 1
        // Predicated region
        $region13: #{conv1_forward.1} parent=11 // pred_check
          %p121 = pneg %p59
        $region14: #{conv1_forward.1} parent=11 // pred_check_branch
          %123 = sbr.rel (%p121) target = $region16
        $region15: #{conv1_forward.1} parent=11 // pred_region
          _
        $region16: #{conv1_forward.1} parent=11 // pred_fallthru
          _
        // Predicated region
        $region17: #{conv1_forward.1} parent=11 // pred_check
          %p124 = pneg %p80
        $region18: #{conv1_forward.1} parent=11 // pred_check_branch
          %126 = sbr.rel (%p124) target = $region20
        $region19: #{conv1_forward.1} parent=11 // pred_region
          _
        $region20: #{conv1_forward.1} parent=11 // pred_fallthru
          _
      $region12: #{conv1_forward.1} parent=5 // pred_fallthru
        _
      %p127 = scmp.lt.s32.totalorder %s12, 2
      // Predicated region
      $region21: #{conv1_forward.1} parent=5 // pred_check
        %p128 = pneg %p127
      $region22: #{conv1_forward.1} parent=5 // pred_check_branch
        %130 = sbr.rel (%p128) target = $region24
      $region23: #{conv1_forward.1} parent=5 // pred_region
        // Predicated region
        $region25: #{conv1_forward.1} parent=23 // pred_check
          %p131 = pneg %p32
        $region26: #{conv1_forward.1} parent=23 // pred_check_branch
          %133 = sbr.rel (%p131) target = $region28
        $region27: #{conv1_forward.1} parent=23 // pred_region
          %s134 = sand.u32 %s22, 1
          %s135 = scalar_lea.sflag [#allocation5], %s134
          %s136 = sand.u32 %s22, 1
          %s137 = smul.addr %s136, 96
          %s138 = scalar_lea.vmem [#allocation4], %s137
          %140 = vsyncadd %s135, 0
          %s141 = smul.addr %s12, 12
          %s142 = smul.addr %s141, 8
          %s143 = scalar_lea.hbm %s0, %s142
          %s144 = sshll.u32 %s143, 4
          %s145 = int_to_ptr.hbm [resolvable:$true] %s144
          %s146 = sshll.u32 %s138, 4
          %s147 = int_to_ptr.vmem [resolvable:$true] %s146
          %152 = dma.hbm_to_vmem [thread:$0]  %s145, 1536, %s147, %s135, 128, 128, 8
        $region28: #{conv1_forward.1} parent=23 // pred_fallthru
          _
      $region24: #{conv1_forward.1} parent=5 // pred_fallthru
        _
      %p153 = scmp.le.s32.totalorder 1, %s12
      %p154 = scmp.lt.s32.totalorder %s12, 3
      %p155 = pnand %p153, %p154
      %p156 = pneg %p155
      // Predicated region
      $region29: #{conv1_forward.1} parent=5 // pred_check
        _
      $region30: #{conv1_forward.1} parent=5 // pred_check_branch
        %158 = sbr.rel (%p155) target = $region32
      $region31: #{conv1_forward.1} parent=5 // pred_region
        %s159 = ssub.s32 %s12, 1
        %s160 = sand.u32 %s25, 1
        %s161 = scalar_lea.sflag [#allocation5], %s160
        %s162 = sand.u32 %s25, 1
        %s163 = smul.addr %s162, 96
        %s164 = scalar_lea.vmem [#allocation4], %s163
        // Predicated region
        $region33: #{conv1_forward.1} parent=31 // pred_check
          %p165 = pneg %p38
        $region34: #{conv1_forward.1} parent=31 // pred_check_branch
          %167 = sbr.rel (%p165) target = $region36
        $region35: #{conv1_forward.1} parent=31 // pred_region
          %169 = dma.done %s161, 1536
        $region36: #{conv1_forward.1} parent=31 // pred_fallthru
          _
        %s170 = sand.u32 %s25, 1
        %s171 = scalar_lea.sflag [#allocation5], %s170
        %s172 = sand.u32 %s25, 1
        %s173 = smul.addr %s172, 96
        %s174 = scalar_lea.vmem [#allocation4], %s173
        %p175 = pneg %p38
        %p176 = pneg %p35
        %p177 = pneg %p59
        %p178 = pneg %p56
        %p179 = pneg %p80
        %p180 = pneg %p77
        %p181 = pneg %p106
        %p182 = pneg %p103
        %p183 = scmp.lt.s32.totalorder %s17, 1
        %s184 = scalar_select %p183, %s17, 1
        %s185 = smul.addr %s184, 12
        %s186 = smul.addr %s185, 8
        %s187 = scalar_lea.vmem %s3, %s186
        %p188 = scmp.lt.s32.totalorder %s17, 1
        %s189 = scalar_select %p188, %s17, 1
        %s190 = smul.addr %s189, 12
        %s191 = smul.addr %s190, 8
        %s192 = scalar_lea.vmem %s3, %s191
        %v193 = vld [vmem:[%s164] sm:$0xff]
        %v194 = vld [vmem:[%s164 + $0x8] sm:$0xff]
        %v195 = vld [vmem:[%s164 + $0x10] sm:$0xff]
        %v196 = vld [vmem:[%s164 + $0x18] sm:$0xff]
        %v197 = vld [vmem:[%s164 + $0x20] sm:$0xff]
        %v198 = vld [vmem:[%s164 + $0x28] sm:$0xff]
        %v199 = vld [vmem:[%s164 + $0x30] sm:$0xff]
        %v200 = vld [vmem:[%s164 + $0x38] sm:$0xff]
        %v201 = vld [vmem:[%s164 + $0x40] sm:$0xff]
        %v202 = vld [vmem:[%s164 + $0x48] sm:$0xff]
        %v203 = vld [vmem:[%s164 + $0x50] sm:$0xff]
        %v204 = vld [vmem:[%s164 + $0x58] sm:$0xff]
        %v205 = vld [vmem:[%s1] sm:$0xff]
        %v206 = vld [vmem:[%s1 + $0x8] sm:$0xff]
        %v207 = vld [vmem:[%s1 + $0x10] sm:$0xff]
        %v208 = vld [vmem:[%s1 + $0x18] sm:$0xff]
        %vm209 = vcmask 261120
        %v211 = vsel %vm209, %v193, 0
        %v214 = vsel %vm209, %v194, 0
        %v217 = vsel %vm209, %v195, 0
        %v220 = vsel %vm209, %v196, 0
        %v223 = vsel %vm209, %v197, 0
        %v226 = vsel %vm209, %v198, 0
        %v229 = vsel %vm209, %v199, 0
        %v232 = vsel %vm209, %v200, 0
        %v235 = vsel %vm209, %v201, 0
        %v238 = vsel %vm209, %v202, 0
        %v241 = vsel %vm209, %v203, 0
        %v244 = vsel %vm209, %v204, 0
        %246 = vmatpush.msra.mxu0 0.0
        %247 = vmatpush.msra.mxu0 0.0
        %248 = vmatpush.msra.mxu0 0.0
        %249 = vmatpush.msra.mxu0 0.0
        %250 = vmatpush.msra.mxu0 0.0
        %251 = vmatpush.msra.mxu0 0.0
        %252 = vmatpush.msra.mxu0 0.0
        %253 = vmatpush.msra.mxu0 0.0
        %254 = vmatpush.msra.mxu0 0.0
        %255 = vmatpush.msra.mxu0 0.0
        %256 = vmatpush.msra.mxu0 0.0
        %257 = vmatpush.msra.mxu0 0.0
        %258 = vmatpush.msra.mxu0 %v208
        %259 = vmatpush.msra.mxu0 %v207
        %260 = vmatpush.msra.mxu0 %v206
        %261 = vmatpush.msra.mxu0 %v205
        %262 = vmatmul.f32.gmra.mxu0 %v211
        %v263 = vpop.f32.mrf.mxu0
        %v264 = vadd.f32 0.0, %v263
        %265 = vmatmul.f32.gmra.mxu0 %v214
        %v266 = vpop.f32.mrf.mxu0
        %v267 = vadd.f32 0.0, %v266
        %268 = vmatmul.f32.gmra.mxu0 %v217
        %v269 = vpop.f32.mrf.mxu0
        %v270 = vadd.f32 0.0, %v269
        %271 = vmatmul.f32.gmra.mxu0 %v220
        %v272 = vpop.f32.mrf.mxu0
        %v273 = vadd.f32 0.0, %v272
        %274 = vmatmul.f32.gmra.mxu0 %v223
        %v275 = vpop.f32.mrf.mxu0
        %v276 = vadd.f32 0.0, %v275
        %277 = vmatmul.f32.gmra.mxu0 %v226
        %v278 = vpop.f32.mrf.mxu0
        %v279 = vadd.f32 0.0, %v278
        %280 = vmatmul.f32.gmra.mxu0 %v229
        %v281 = vpop.f32.mrf.mxu0
        %v282 = vadd.f32 0.0, %v281
        %283 = vmatmul.f32.gmra.mxu0 %v232
        %v284 = vpop.f32.mrf.mxu0
        %v285 = vadd.f32 0.0, %v284
        %286 = vmatmul.f32.gmra.mxu0 %v235
        %v287 = vpop.f32.mrf.mxu0
        %v288 = vadd.f32 0.0, %v287
        %289 = vmatmul.f32.gmra.mxu0 %v238
        %v290 = vpop.f32.mrf.mxu0
        %v291 = vadd.f32 0.0, %v290
        %292 = vmatmul.f32.gmra.mxu0 %v241
        %v293 = vpop.f32.mrf.mxu0
        %v294 = vadd.f32 0.0, %v293
        %295 = vmatmul.f32.gmra.mxu0 %v244
        %v296 = vpop.f32.mrf.mxu0
        %v297 = vadd.f32 0.0, %v296
        %298 = vdwg.mxu0
        %299 = vst.msk [vmem:[#allocation2] sm:$0xff] %vm209, %v264
        %300 = vst.msk [vmem:[#allocation2 + $0x8] sm:$0xff] %vm209, %v267
        %301 = vst.msk [vmem:[#allocation2 + $0x10] sm:$0xff] %vm209, %v270
        %302 = vst.msk [vmem:[#allocation2 + $0x18] sm:$0xff] %vm209, %v273
        %303 = vst.msk [vmem:[#allocation2 + $0x20] sm:$0xff] %vm209, %v276
        %304 = vst.msk [vmem:[#allocation2 + $0x28] sm:$0xff] %vm209, %v279
        %305 = vst.msk [vmem:[#allocation2 + $0x30] sm:$0xff] %vm209, %v282
        %306 = vst.msk [vmem:[#allocation2 + $0x38] sm:$0xff] %vm209, %v285
        %307 = vst.msk [vmem:[#allocation2 + $0x40] sm:$0xff] %vm209, %v288
        %308 = vst.msk [vmem:[#allocation2 + $0x48] sm:$0xff] %vm209, %v291
        %309 = vst.msk [vmem:[#allocation2 + $0x50] sm:$0xff] %vm209, %v294
        %310 = vst.msk [vmem:[#allocation2 + $0x58] sm:$0xff] %vm209, %v297
        %311 = vst [vmem:[#allocation3] sm:$0xff] 0.0
        %312 = vst [vmem:[#allocation3 + $0x8] sm:$0xff] 0.0
        %vm313 = vcmask 556032
        %314 = vst.msk [vmem:[#allocation3 + $0x10] sm:$0xff] %vm313, 0.0
        %315 = vst [vmem:[#allocation3 + $0x18] sm:$0xf] 0.0
        %316 = vst [vmem:[#allocation3 + $0x20] sm:$0xf] 0.0
        %vm317 = vcmask 551936
        %318 = vst.msk [vmem:[#allocation3 + $0x28] sm:$0xf] %vm317, 0.0
        %v319 = vld [vmem:[#allocation2] sm:$0x3]
        %321 = vrot.lane.b32.xlu0 %v319, 19
        %v322 = vpop.permute.xlu0 %321
        %vm324 = vcmask 279704
        %325 = vst.msk [vmem:[#allocation3] sm:$0x3] %vm324, %v322
        %v326 = vrot.slane %v319, 2
        %327 = vrot.lane.b32.xlu0 %v326, 3
        %v328 = vpop.permute.xlu0 %327
        %vm330 = vcmask 285854
        %331 = vst.msk [vmem:[#allocation3] sm:$0xc0] %vm330, %v328
        %v332 = vld [vmem:[#allocation2 + $0x20] sm:$0x3]
        %v334 = vrot.slane %v332, 6
        %335 = vrot.lane.b32.xlu0 %v334, 19
        %v336 = vpop.permute.xlu0 %335
        %vm338 = vcmask 281754
        %339 = vst.msk [vmem:[#allocation3] sm:$0xc] %vm338, %v336
        %340 = vrot.lane.b32.xlu0 %v332, 3
        %v341 = vpop.permute.xlu0 %340
        %343 = vst.msk [vmem:[#allocation3 + $0x18] sm:$0x3] %vm324, %v341
        %v344 = vld [vmem:[#allocation2 + $0x40] sm:$0x3]
        %v346 = vrot.slane %v344, 4
        %347 = vrot.lane.b32.xlu0 %v346, 19
        %v348 = vpop.permute.xlu0 %347
        %vm350 = vcmask 283804
        %351 = vst.msk [vmem:[#allocation3] sm:$0x30] %vm350, %v348
        %v352 = vrot.slane %v344, 6
        %353 = vrot.lane.b32.xlu0 %v352, 3
        %v354 = vpop.permute.xlu0 %353
        %356 = vst.msk [vmem:[#allocation3 + $0x18] sm:$0xc] %vm338, %v354
        %v357 = vld [vmem:[#allocation2 + $0x2] sm:$0x3]
        %359 = vrot.lane.b32.xlu0 %v357, 37
        %v360 = vpop.permute.xlu0 %359
        %vm362 = vcmask 427304
        %363 = vst.msk [vmem:[#allocation3] sm:$0x3] %vm362, %v360
        %v364 = vrot.slane %v357, 2
        %365 = vrot.lane.b32.xlu0 %v364, 21
        %v366 = vpop.permute.xlu0 %365
        %vm368 = vcmask 433454
        %369 = vst.msk [vmem:[#allocation3] sm:$0xc0] %vm368, %v366
        %v370 = vld [vmem:[#allocation2 + $0x22] sm:$0x3]
        %v372 = vrot.slane %v370, 6
        %373 = vrot.lane.b32.xlu0 %v372, 37
        %v374 = vpop.permute.xlu0 %373
        %vm376 = vcmask 429354
        %377 = vst.msk [vmem:[#allocation3] sm:$0xc] %vm376, %v374
        %378 = vrot.lane.b32.xlu0 %v370, 21
        %v379 = vpop.permute.xlu0 %378
        %381 = vst.msk [vmem:[#allocation3 + $0x18] sm:$0x3] %vm362, %v379
        %v382 = vld [vmem:[#allocation2 + $0x42] sm:$0x3]
        %v384 = vrot.slane %v382, 4
        %385 = vrot.lane.b32.xlu0 %v384, 37
        %v386 = vpop.permute.xlu0 %385
        %vm388 = vcmask 431404
        %389 = vst.msk [vmem:[#allocation3] sm:$0x30] %vm388, %v386
        %v390 = vrot.slane %v382, 6
        %391 = vrot.lane.b32.xlu0 %v390, 21
        %v392 = vpop.permute.xlu0 %391
        %394 = vst.msk [vmem:[#allocation3 + $0x18] sm:$0xc] %vm376, %v392
        %v395 = vld [vmem:[#allocation2 + $0x4] sm:$0x3]
        %397 = vrot.lane.b32.xlu0 %v395, 55
        %v398 = vpop.permute.xlu0 %397
        %vm400 = vcmask 574904
        %401 = vst.msk [vmem:[#allocation3] sm:$0x3] %vm400, %v398
        %v402 = vrot.slane %v395, 2
        %403 = vrot.lane.b32.xlu0 %v402, 39
        %v404 = vpop.permute.xlu0 %403
        %vm406 = vcmask 581054
        %407 = vst.msk [vmem:[#allocation3] sm:$0xc0] %vm406, %v404
        %v408 = vld [vmem:[#allocation2 + $0x24] sm:$0x3]
        %v410 = vrot.slane %v408, 6
        %411 = vrot.lane.b32.xlu0 %v410, 55
        %v412 = vpop.permute.xlu0 %411
        %vm414 = vcmask 576954
        %415 = vst.msk [vmem:[#allocation3] sm:$0xc] %vm414, %v412
        %416 = vrot.lane.b32.xlu0 %v408, 39
        %v417 = vpop.permute.xlu0 %416
        %419 = vst.msk [vmem:[#allocation3 + $0x18] sm:$0x3] %vm400, %v417
        %v420 = vld [vmem:[#allocation2 + $0x44] sm:$0x3]
        %v422 = vrot.slane %v420, 4
        %423 = vrot.lane.b32.xlu0 %v422, 55
        %v424 = vpop.permute.xlu0 %423
        %vm426 = vcmask 579004
        %427 = vst.msk [vmem:[#allocation3] sm:$0x30] %vm426, %v424
        %v428 = vrot.slane %v420, 6
        %429 = vrot.lane.b32.xlu0 %v428, 39
        %v430 = vpop.permute.xlu0 %429
        %432 = vst.msk [vmem:[#allocation3 + $0x18] sm:$0xc] %vm414, %v430
        %v433 = vld [vmem:[#allocation2 + $0x6] sm:$0x3]
        %435 = vrot.lane.b32.xlu0 %v433, 73
        %v436 = vpop.permute.xlu0 %435
        %vm438 = vcmask 722504
        %439 = vst.msk [vmem:[#allocation3] sm:$0x3] %vm438, %v436
        %v440 = vrot.slane %v433, 2
        %441 = vrot.lane.b32.xlu0 %v440, 57
        %v442 = vpop.permute.xlu0 %441
        %vm444 = vcmask 728654
        %445 = vst.msk [vmem:[#allocation3] sm:$0xc0] %vm444, %v442
        %v446 = vld [vmem:[#allocation2 + $0x26] sm:$0x3]
        %v448 = vrot.slane %v446, 6
        %449 = vrot.lane.b32.xlu0 %v448, 73
        %v450 = vpop.permute.xlu0 %449
        %vm452 = vcmask 724554
        %453 = vst.msk [vmem:[#allocation3] sm:$0xc] %vm452, %v450
        %454 = vrot.lane.b32.xlu0 %v446, 57
        %v455 = vpop.permute.xlu0 %454
        %457 = vst.msk [vmem:[#allocation3 + $0x18] sm:$0x3] %vm438, %v455
        %v458 = vld [vmem:[#allocation2 + $0x46] sm:$0x3]
        %v460 = vrot.slane %v458, 4
        %461 = vrot.lane.b32.xlu0 %v460, 73
        %v462 = vpop.permute.xlu0 %461
        %vm464 = vcmask 726604
        %465 = vst.msk [vmem:[#allocation3] sm:$0x30] %vm464, %v462
        %v466 = vrot.slane %v458, 6
        %467 = vrot.lane.b32.xlu0 %v466, 57
        %v468 = vpop.permute.xlu0 %467
        %470 = vst.msk [vmem:[#allocation3 + $0x18] sm:$0xc] %vm452, %v468
        %v471 = vld [vmem:[#allocation2 + $0x8] sm:$0x3]
        %473 = vrot.lane.b32.xlu0 %v471, 91
        %v474 = vpop.permute.xlu0 %473
        %vm476 = vcmask 870104
        %477 = vst.msk [vmem:[#allocation3] sm:$0x3] %vm476, %v474
        %v478 = vrot.slane %v471, 2
        %479 = vrot.lane.b32.xlu0 %v478, 75
        %v480 = vpop.permute.xlu0 %479
        %vm482 = vcmask 876254
        %483 = vst.msk [vmem:[#allocation3] sm:$0xc0] %vm482, %v480
        %v484 = vld [vmem:[#allocation2 + $0x28] sm:$0x3]
        %v486 = vrot.slane %v484, 6
        %487 = vrot.lane.b32.xlu0 %v486, 91
        %v488 = vpop.permute.xlu0 %487
        %vm490 = vcmask 872154
        %491 = vst.msk [vmem:[#allocation3] sm:$0xc] %vm490, %v488
        %492 = vrot.lane.b32.xlu0 %v484, 75
        %v493 = vpop.permute.xlu0 %492
        %495 = vst.msk [vmem:[#allocation3 + $0x18] sm:$0x3] %vm476, %v493
        %v496 = vld [vmem:[#allocation2 + $0x48] sm:$0x3]
        %v498 = vrot.slane %v496, 4
        %499 = vrot.lane.b32.xlu0 %v498, 91
        %v500 = vpop.permute.xlu0 %499
        %vm502 = vcmask 874204
        %503 = vst.msk [vmem:[#allocation3] sm:$0x30] %vm502, %v500
        %v504 = vrot.slane %v496, 6
        %505 = vrot.lane.b32.xlu0 %v504, 75
        %v506 = vpop.permute.xlu0 %505
        %508 = vst.msk [vmem:[#allocation3 + $0x18] sm:$0xc] %vm490, %v506
        %v509 = vld [vmem:[#allocation2 + $0xa] sm:$0x3]
        %511 = vrot.lane.b32.xlu0 %v509, 109
        %v512 = vpop.permute.xlu0 %511
        %vm514 = vcmask 1017704
        %515 = vst.msk [vmem:[#allocation3] sm:$0x3] %vm514, %v512
        %v516 = vrot.slane %v509, 2
        %517 = vrot.lane.b32.xlu0 %v516, 93
        %v518 = vpop.permute.xlu0 %517
        %vm520 = vcmask 1023854
        %521 = vst.msk [vmem:[#allocation3] sm:$0xc0] %vm520, %v518
        %v522 = vld [vmem:[#allocation2 + $0x2a] sm:$0x3]
        %v524 = vrot.slane %v522, 6
        %525 = vrot.lane.b32.xlu0 %v524, 109
        %v526 = vpop.permute.xlu0 %525
        %vm528 = vcmask 1019754
        %529 = vst.msk [vmem:[#allocation3] sm:$0xc] %vm528, %v526
        %530 = vrot.lane.b32.xlu0 %v522, 93
        %v531 = vpop.permute.xlu0 %530
        %533 = vst.msk [vmem:[#allocation3 + $0x18] sm:$0x3] %vm514, %v531
        %v534 = vld [vmem:[#allocation2 + $0x4a] sm:$0x3]
        %v536 = vrot.slane %v534, 4
        %537 = vrot.lane.b32.xlu0 %v536, 109
        %v538 = vpop.permute.xlu0 %537
        %vm540 = vcmask 1021804
        %541 = vst.msk [vmem:[#allocation3] sm:$0x30] %vm540, %v538
        %v542 = vrot.slane %v534, 6
        %543 = vrot.lane.b32.xlu0 %v542, 93
        %v544 = vpop.permute.xlu0 %543
        %546 = vst.msk [vmem:[#allocation3 + $0x18] sm:$0xc] %vm528, %v544
        %v547 = vld [vmem:[#allocation2 + $0xc] sm:$0x3]
        %549 = vrot.lane.b32.xlu0 %v547, 127
        %v550 = vpop.permute.xlu0 %549
        %vm552 = vcmask 1042424
        %553 = vst.msk [vmem:[#allocation3] sm:$0x3] %vm552, %v550
        %vm554 = vcmask 115712
        %555 = vst.msk [vmem:[#allocation3 + $0x8] sm:$0x3] %vm554, %v550
        %v556 = vrot.slane %v547, 2
        %557 = vrot.lane.b32.xlu0 %v556, 111
        %v558 = vpop.permute.xlu0 %557
        %vm560 = vcmask 1048574
        %561 = vst.msk [vmem:[#allocation3] sm:$0xc0] %vm560, %v558
        %vm562 = vcmask 121862
        %563 = vst.msk [vmem:[#allocation3 + $0x8] sm:$0xc0] %vm562, %v558
        %v564 = vld [vmem:[#allocation2 + $0x2c] sm:$0x3]
        %v566 = vrot.slane %v564, 6
        %567 = vrot.lane.b32.xlu0 %v566, 127
        %v568 = vpop.permute.xlu0 %567
        %vm570 = vcmask 1044474
        %571 = vst.msk [vmem:[#allocation3] sm:$0xc] %vm570, %v568
        %vm572 = vcmask 117762
        %573 = vst.msk [vmem:[#allocation3 + $0x8] sm:$0xc] %vm572, %v568
        %574 = vrot.lane.b32.xlu0 %v564, 111
        %v575 = vpop.permute.xlu0 %574
        %577 = vst.msk [vmem:[#allocation3 + $0x18] sm:$0x3] %vm552, %v575
        %578 = vst.msk [vmem:[#allocation3 + $0x20] sm:$0x3] %vm554, %v575
        %v579 = vld [vmem:[#allocation2 + $0x4c] sm:$0x3]
        %v581 = vrot.slane %v579, 4
        %582 = vrot.lane.b32.xlu0 %v581, 127
        %v583 = vpop.permute.xlu0 %582
        %vm585 = vcmask 1046524
        %586 = vst.msk [vmem:[#allocation3] sm:$0x30] %vm585, %v583
        %vm587 = vcmask 119812
        %588 = vst.msk [vmem:[#allocation3 + $0x8] sm:$0x30] %vm587, %v583
        %v589 = vrot.slane %v579, 6
        %590 = vrot.lane.b32.xlu0 %v589, 111
        %v591 = vpop.permute.xlu0 %590
        %593 = vst.msk [vmem:[#allocation3 + $0x18] sm:$0xc] %vm570, %v591
        %594 = vst.msk [vmem:[#allocation3 + $0x20] sm:$0xc] %vm572, %v591
        %v595 = vld [vmem:[#allocation2 + $0xe] sm:$0x3]
        %597 = vrot.lane.b32.xlu0 %v595, 17
        %v598 = vpop.permute.xlu0 %597
        %vm600 = vcmask 263304
        %601 = vst.msk [vmem:[#allocation3 + $0x8] sm:$0x3] %vm600, %v598
        %v602 = vrot.slane %v595, 2
        %603 = vrot.lane.b32.xlu0 %v602, 1
        %v604 = vpop.permute.xlu0 %603
        %vm606 = vcmask 269454
        %607 = vst.msk [vmem:[#allocation3 + $0x8] sm:$0xc0] %vm606, %v604
        %v608 = vld [vmem:[#allocation2 + $0x2e] sm:$0x3]
        %v610 = vrot.slane %v608, 6
        %611 = vrot.lane.b32.xlu0 %v610, 17
        %v612 = vpop.permute.xlu0 %611
        %vm614 = vcmask 265354
        %615 = vst.msk [vmem:[#allocation3 + $0x8] sm:$0xc] %vm614, %v612
        %616 = vrot.lane.b32.xlu0 %v608, 1
        %v617 = vpop.permute.xlu0 %616
        %619 = vst.msk [vmem:[#allocation3 + $0x20] sm:$0x3] %vm600, %v617
        %v620 = vld [vmem:[#allocation2 + $0x4e] sm:$0x3]
        %v622 = vrot.slane %v620, 4
        %623 = vrot.lane.b32.xlu0 %v622, 17
        %v624 = vpop.permute.xlu0 %623
        %vm626 = vcmask 267404
        %627 = vst.msk [vmem:[#allocation3 + $0x8] sm:$0x30] %vm626, %v624
        %v628 = vrot.slane %v620, 6
        %629 = vrot.lane.b32.xlu0 %v628, 1
        %v630 = vpop.permute.xlu0 %629
        %632 = vst.msk [vmem:[#allocation3 + $0x20] sm:$0xc] %vm614, %v630
        %v633 = vld [vmem:[#allocation2 + $0x10] sm:$0x3]
        %635 = vrot.lane.b32.xlu0 %v633, 35
        %v636 = vpop.permute.xlu0 %635
        %vm638 = vcmask 410904
        %639 = vst.msk [vmem:[#allocation3 + $0x8] sm:$0x3] %vm638, %v636
        %v640 = vrot.slane %v633, 2
        %641 = vrot.lane.b32.xlu0 %v640, 19
        %v642 = vpop.permute.xlu0 %641
        %vm644 = vcmask 417054
        %645 = vst.msk [vmem:[#allocation3 + $0x8] sm:$0xc0] %vm644, %v642
        %v646 = vld [vmem:[#allocation2 + $0x30] sm:$0x3]
        %v648 = vrot.slane %v646, 6
        %649 = vrot.lane.b32.xlu0 %v648, 35
        %v650 = vpop.permute.xlu0 %649
        %vm652 = vcmask 412954
        %653 = vst.msk [vmem:[#allocation3 + $0x8] sm:$0xc] %vm652, %v650
        %654 = vrot.lane.b32.xlu0 %v646, 19
        %v655 = vpop.permute.xlu0 %654
        %657 = vst.msk [vmem:[#allocation3 + $0x20] sm:$0x3] %vm638, %v655
        %v658 = vld [vmem:[#allocation2 + $0x50] sm:$0x3]
        %v660 = vrot.slane %v658, 4
        %661 = vrot.lane.b32.xlu0 %v660, 35
        %v662 = vpop.permute.xlu0 %661
        %vm664 = vcmask 415004
        %665 = vst.msk [vmem:[#allocation3 + $0x8] sm:$0x30] %vm664, %v662
        %v666 = vrot.slane %v658, 6
        %667 = vrot.lane.b32.xlu0 %v666, 19
        %v668 = vpop.permute.xlu0 %667
        %670 = vst.msk [vmem:[#allocation3 + $0x20] sm:$0xc] %vm652, %v668
        %v671 = vld [vmem:[#allocation2 + $0x12] sm:$0x3]
        %673 = vrot.lane.b32.xlu0 %v671, 53
        %v674 = vpop.permute.xlu0 %673
        %vm676 = vcmask 558504
        %677 = vst.msk [vmem:[#allocation3 + $0x8] sm:$0x3] %vm676, %v674
        %v678 = vrot.slane %v671, 2
        %679 = vrot.lane.b32.xlu0 %v678, 37
        %v680 = vpop.permute.xlu0 %679
        %vm682 = vcmask 564654
        %683 = vst.msk [vmem:[#allocation3 + $0x8] sm:$0xc0] %vm682, %v680
        %v684 = vld [vmem:[#allocation2 + $0x32] sm:$0x3]
        %v686 = vrot.slane %v684, 6
        %687 = vrot.lane.b32.xlu0 %v686, 53
        %v688 = vpop.permute.xlu0 %687
        %vm690 = vcmask 560554
        %691 = vst.msk [vmem:[#allocation3 + $0x8] sm:$0xc] %vm690, %v688
        %692 = vrot.lane.b32.xlu0 %v684, 37
        %v693 = vpop.permute.xlu0 %692
        %695 = vst.msk [vmem:[#allocation3 + $0x20] sm:$0x3] %vm676, %v693
        %v696 = vld [vmem:[#allocation2 + $0x52] sm:$0x3]
        %v698 = vrot.slane %v696, 4
        %699 = vrot.lane.b32.xlu0 %v698, 53
        %v700 = vpop.permute.xlu0 %699
        %vm702 = vcmask 562604
        %703 = vst.msk [vmem:[#allocation3 + $0x8] sm:$0x30] %vm702, %v700
        %v704 = vrot.slane %v696, 6
        %705 = vrot.lane.b32.xlu0 %v704, 37
        %v706 = vpop.permute.xlu0 %705
        %708 = vst.msk [vmem:[#allocation3 + $0x20] sm:$0xc] %vm690, %v706
        %v709 = vld [vmem:[#allocation2 + $0x14] sm:$0x3]
        %711 = vrot.lane.b32.xlu0 %v709, 71
        %v712 = vpop.permute.xlu0 %711
        %vm714 = vcmask 706104
        %715 = vst.msk [vmem:[#allocation3 + $0x8] sm:$0x3] %vm714, %v712
        %v716 = vrot.slane %v709, 2
        %717 = vrot.lane.b32.xlu0 %v716, 55
        %v718 = vpop.permute.xlu0 %717
        %vm720 = vcmask 712254
        %721 = vst.msk [vmem:[#allocation3 + $0x8] sm:$0xc0] %vm720, %v718
        %v722 = vld [vmem:[#allocation2 + $0x34] sm:$0x3]
        %v724 = vrot.slane %v722, 6
        %725 = vrot.lane.b32.xlu0 %v724, 71
        %v726 = vpop.permute.xlu0 %725
        %vm728 = vcmask 708154
        %729 = vst.msk [vmem:[#allocation3 + $0x8] sm:$0xc] %vm728, %v726
        %730 = vrot.lane.b32.xlu0 %v722, 55
        %v731 = vpop.permute.xlu0 %730
        %733 = vst.msk [vmem:[#allocation3 + $0x20] sm:$0x3] %vm714, %v731
        %v734 = vld [vmem:[#allocation2 + $0x54] sm:$0x3]
        %v736 = vrot.slane %v734, 4
        %737 = vrot.lane.b32.xlu0 %v736, 71
        %v738 = vpop.permute.xlu0 %737
        %vm740 = vcmask 710204
        %741 = vst.msk [vmem:[#allocation3 + $0x8] sm:$0x30] %vm740, %v738
        %v742 = vrot.slane %v734, 6
        %743 = vrot.lane.b32.xlu0 %v742, 55
        %v744 = vpop.permute.xlu0 %743
        %746 = vst.msk [vmem:[#allocation3 + $0x20] sm:$0xc] %vm728, %v744
        %v747 = vld [vmem:[#allocation2 + $0x16] sm:$0x3]
        %749 = vrot.lane.b32.xlu0 %v747, 89
        %v750 = vpop.permute.xlu0 %749
        %vm752 = vcmask 853704
        %753 = vst.msk [vmem:[#allocation3 + $0x8] sm:$0x3] %vm752, %v750
        %v754 = vrot.slane %v747, 2
        %755 = vrot.lane.b32.xlu0 %v754, 73
        %v756 = vpop.permute.xlu0 %755
        %vm758 = vcmask 859854
        %759 = vst.msk [vmem:[#allocation3 + $0x8] sm:$0xc0] %vm758, %v756
        %v760 = vld [vmem:[#allocation2 + $0x36] sm:$0x3]
        %v762 = vrot.slane %v760, 6
        %763 = vrot.lane.b32.xlu0 %v762, 89
        %v764 = vpop.permute.xlu0 %763
        %vm766 = vcmask 855754
        %767 = vst.msk [vmem:[#allocation3 + $0x8] sm:$0xc] %vm766, %v764
        %768 = vrot.lane.b32.xlu0 %v760, 73
        %v769 = vpop.permute.xlu0 %768
        %771 = vst.msk [vmem:[#allocation3 + $0x20] sm:$0x3] %vm752, %v769
        %v772 = vld [vmem:[#allocation2 + $0x56] sm:$0x3]
        %v774 = vrot.slane %v772, 4
        %775 = vrot.lane.b32.xlu0 %v774, 89
        %v776 = vpop.permute.xlu0 %775
        %vm778 = vcmask 857804
        %779 = vst.msk [vmem:[#allocation3 + $0x8] sm:$0x30] %vm778, %v776
        %v780 = vrot.slane %v772, 6
        %781 = vrot.lane.b32.xlu0 %v780, 73
        %v782 = vpop.permute.xlu0 %781
        %784 = vst.msk [vmem:[#allocation3 + $0x20] sm:$0xc] %vm766, %v782
        %v785 = vld [vmem:[#allocation2 + $0x18] sm:$0x3]
        %787 = vrot.lane.b32.xlu0 %v785, 107
        %v788 = vpop.permute.xlu0 %787
        %vm790 = vcmask 1001304
        %791 = vst.msk [vmem:[#allocation3 + $0x8] sm:$0x3] %vm790, %v788
        %v792 = vrot.slane %v785, 2
        %793 = vrot.lane.b32.xlu0 %v792, 91
        %v794 = vpop.permute.xlu0 %793
        %vm796 = vcmask 1007454
        %797 = vst.msk [vmem:[#allocation3 + $0x8] sm:$0xc0] %vm796, %v794
        %v798 = vld [vmem:[#allocation2 + $0x38] sm:$0x3]
        %v800 = vrot.slane %v798, 6
        %801 = vrot.lane.b32.xlu0 %v800, 107
        %v802 = vpop.permute.xlu0 %801
        %vm804 = vcmask 1003354
        %805 = vst.msk [vmem:[#allocation3 + $0x8] sm:$0xc] %vm804, %v802
        %806 = vrot.lane.b32.xlu0 %v798, 91
        %v807 = vpop.permute.xlu0 %806
        %809 = vst.msk [vmem:[#allocation3 + $0x20] sm:$0x3] %vm790, %v807
        %v810 = vld [vmem:[#allocation2 + $0x58] sm:$0x3]
        %v812 = vrot.slane %v810, 4
        %813 = vrot.lane.b32.xlu0 %v812, 107
        %v814 = vpop.permute.xlu0 %813
        %vm816 = vcmask 1005404
        %817 = vst.msk [vmem:[#allocation3 + $0x8] sm:$0x30] %vm816, %v814
        %v818 = vrot.slane %v810, 6
        %819 = vrot.lane.b32.xlu0 %v818, 91
        %v820 = vpop.permute.xlu0 %819
        %822 = vst.msk [vmem:[#allocation3 + $0x20] sm:$0xc] %vm804, %v820
        %v823 = vld [vmem:[#allocation2 + $0x1a] sm:$0x3]
        %825 = vrot.lane.b32.xlu0 %v823, 125
        %v826 = vpop.permute.xlu0 %825
        %vm828 = vcmask 1042408
        %829 = vst.msk [vmem:[#allocation3 + $0x8] sm:$0x3] %vm828, %v826
        %vm830 = vcmask 99328
        %831 = vst.msk [vmem:[#allocation3 + $0x10] sm:$0x3] %vm830, %v826
        %v832 = vrot.slane %v823, 2
        %833 = vrot.lane.b32.xlu0 %v832, 109
        %v834 = vpop.permute.xlu0 %833
        %vm836 = vcmask 1048558
        %837 = vst.msk [vmem:[#allocation3 + $0x8] sm:$0xc0] %vm836, %v834
        %vm838 = vcmask 105478
        %839 = vst.msk [vmem:[#allocation3 + $0x10] sm:$0xc0] %vm838, %v834
        %v840 = vld [vmem:[#allocation2 + $0x3a] sm:$0x3]
        %v842 = vrot.slane %v840, 6
        %843 = vrot.lane.b32.xlu0 %v842, 125
        %v844 = vpop.permute.xlu0 %843
        %vm846 = vcmask 1044458
        %847 = vst.msk [vmem:[#allocation3 + $0x8] sm:$0xc] %vm846, %v844
        %vm848 = vcmask 101378
        %849 = vst.msk [vmem:[#allocation3 + $0x10] sm:$0xc] %vm848, %v844
        %850 = vrot.lane.b32.xlu0 %v840, 109
        %v851 = vpop.permute.xlu0 %850
        %853 = vst.msk [vmem:[#allocation3 + $0x20] sm:$0x3] %vm828, %v851
        %854 = vst.msk [vmem:[#allocation3 + $0x28] sm:$0x3] %vm830, %v851
        %v855 = vld [vmem:[#allocation2 + $0x5a] sm:$0x3]
        %v857 = vrot.slane %v855, 4
        %858 = vrot.lane.b32.xlu0 %v857, 125
        %v859 = vpop.permute.xlu0 %858
        %vm861 = vcmask 1046508
        %862 = vst.msk [vmem:[#allocation3 + $0x8] sm:$0x30] %vm861, %v859
        %vm863 = vcmask 103428
        %864 = vst.msk [vmem:[#allocation3 + $0x10] sm:$0x30] %vm863, %v859
        %v865 = vrot.slane %v855, 6
        %866 = vrot.lane.b32.xlu0 %v865, 109
        %v867 = vpop.permute.xlu0 %866
        %869 = vst.msk [vmem:[#allocation3 + $0x20] sm:$0xc] %vm846, %v867
        %870 = vst.msk [vmem:[#allocation3 + $0x28] sm:$0xc] %vm848, %v867
        %v871 = vld [vmem:[#allocation2 + $0x1c] sm:$0x3]
        %873 = vrot.lane.b32.xlu0 %v871, 15
        %v874 = vpop.permute.xlu0 %873
        %vm876 = vcmask 246904
        %877 = vst.msk [vmem:[#allocation3 + $0x10] sm:$0x3] %vm876, %v874
        %v878 = vrot.slane %v871, 2
        %879 = vrot.lane.b32.xlu0 %v878, 127
        %v880 = vpop.permute.xlu0 %879
        %vm882 = vcmask 253054
        %883 = vst.msk [vmem:[#allocation3 + $0x10] sm:$0xc0] %vm882, %v880
        %v884 = vld [vmem:[#allocation2 + $0x3c] sm:$0x3]
        %v886 = vrot.slane %v884, 6
        %887 = vrot.lane.b32.xlu0 %v886, 15
        %v888 = vpop.permute.xlu0 %887
        %vm890 = vcmask 248954
        %891 = vst.msk [vmem:[#allocation3 + $0x10] sm:$0xc] %vm890, %v888
        %892 = vrot.lane.b32.xlu0 %v884, 127
        %v893 = vpop.permute.xlu0 %892
        %895 = vst.msk [vmem:[#allocation3 + $0x28] sm:$0x3] %vm876, %v893
        %v896 = vld [vmem:[#allocation2 + $0x5c] sm:$0x3]
        %v898 = vrot.slane %v896, 4
        %899 = vrot.lane.b32.xlu0 %v898, 15
        %v900 = vpop.permute.xlu0 %899
        %vm902 = vcmask 251004
        %903 = vst.msk [vmem:[#allocation3 + $0x10] sm:$0x30] %vm902, %v900
        %v904 = vrot.slane %v896, 6
        %905 = vrot.lane.b32.xlu0 %v904, 127
        %v906 = vpop.permute.xlu0 %905
        %908 = vst.msk [vmem:[#allocation3 + $0x28] sm:$0xc] %vm890, %v906
        %v909 = vld [vmem:[#allocation2 + $0x1e] sm:$0x3]
        %911 = vrot.lane.b32.xlu0 %v909, 33
        %v912 = vpop.permute.xlu0 %911
        %vm914 = vcmask 394504
        %915 = vst.msk [vmem:[#allocation3 + $0x10] sm:$0x3] %vm914, %v912
        %v916 = vrot.slane %v909, 2
        %917 = vrot.lane.b32.xlu0 %v916, 17
        %v918 = vpop.permute.xlu0 %917
        %vm920 = vcmask 400654
        %921 = vst.msk [vmem:[#allocation3 + $0x10] sm:$0xc0] %vm920, %v918
        %v922 = vld [vmem:[#allocation2 + $0x3e] sm:$0x3]
        %v924 = vrot.slane %v922, 6
        %925 = vrot.lane.b32.xlu0 %v924, 33
        %v926 = vpop.permute.xlu0 %925
        %vm928 = vcmask 396554
        %929 = vst.msk [vmem:[#allocation3 + $0x10] sm:$0xc] %vm928, %v926
        %930 = vrot.lane.b32.xlu0 %v922, 17
        %v931 = vpop.permute.xlu0 %930
        %933 = vst.msk [vmem:[#allocation3 + $0x28] sm:$0x3] %vm914, %v931
        %v934 = vld [vmem:[#allocation2 + $0x5e] sm:$0x3]
        %v936 = vrot.slane %v934, 4
        %937 = vrot.lane.b32.xlu0 %v936, 33
        %v938 = vpop.permute.xlu0 %937
        %vm940 = vcmask 398604
        %941 = vst.msk [vmem:[#allocation3 + $0x10] sm:$0x30] %vm940, %v938
        %v942 = vrot.slane %v934, 6
        %943 = vrot.lane.b32.xlu0 %v942, 17
        %v944 = vpop.permute.xlu0 %943
        %946 = vst.msk [vmem:[#allocation3 + $0x28] sm:$0xc] %vm928, %v944
        %v947 = vld [vmem:[%s2] sm:$0xff]
        %v948 = vld [vmem:[%s2 + $0x8] sm:$0xff]
        %v949 = vld [vmem:[%s2 + $0x10] sm:$0xff]
        %v950 = vld [vmem:[%s2 + $0x18] sm:$0xff]
        %v951 = vld [vmem:[#allocation3] sm:$0xff]
        %v952 = vld [vmem:[#allocation3 + $0x8] sm:$0xff]
        %v953 = vld [vmem:[#allocation3 + $0x10] sm:$0xff]
        %v954 = vld [vmem:[#allocation3 + $0x18] sm:$0xf]
        %v955 = vld [vmem:[#allocation3 + $0x20] sm:$0xf]
        %v956 = vld [vmem:[#allocation3 + $0x28] sm:$0xf]
        %vm957 = vcmask 97280
        %v959 = vsel %vm957, %v947, 0
        %v962 = vsel %vm957, %v948, 0
        %v965 = vsel %vm957, %v949, 0
        %v968 = vsel %vm957, %v950, 0
        %vm970 = vcmask 1043456
        %v972 = vsel %vm970, %v954, 0
        %v975 = vsel %vm970, %v955, 0
        %v978 = vsel %vm970, %v956, 0
        %980 = vmatpush.msra.mxu0 0.0
        %981 = vmatpush.msra.mxu0 0.0
        %982 = vmatpush.msra.mxu0 0.0
        %983 = vmatpush.msra.mxu0 0.0
        %984 = vmatpush.msra.mxu0 0.0
        %985 = vmatpush.msra.mxu0 0.0
        %986 = vmatpush.msra.mxu0 0.0
        %987 = vmatpush.msra.mxu0 0.0
        %988 = vmatpush.msra.mxu0 0.0
        %989 = vmatpush.msra.mxu0 0.0
        %990 = vmatpush.msra.mxu0 0.0
        %991 = vmatpush.msra.mxu0 0.0
        %992 = vmatpush.msra.mxu0 0.0
        %993 = vmatpush.msra.mxu0 0.0
        %994 = vmatpush.msra.mxu0 %v972
        %995 = vmatpush.msra.mxu0 %v951
        %996 = vmatmul.f32.gmra.mxu0 %v959
        %v997 = vpop.f32.mrf.mxu0
        %v998 = vadd.f32 0.0, %v997
        %999 = vmatmul.f32.gmra.mxu0 %v962
        %v1000 = vpop.f32.mrf.mxu0
        %v1001 = vadd.f32 0.0, %v1000
        %1002 = vmatmul.f32.gmra.mxu0 %v965
        %v1003 = vpop.f32.mrf.mxu0
        %v1004 = vadd.f32 0.0, %v1003
        %1005 = vmatmul.f32.gmra.mxu0 %v968
        %v1006 = vpop.f32.mrf.mxu0
        %v1007 = vadd.f32 0.0, %v1006
        %1008 = vdwg.mxu0
        %1009 = vmatpush.msra.mxu0 0.0
        %1010 = vmatpush.msra.mxu0 0.0
        %1011 = vmatpush.msra.mxu0 0.0
        %1012 = vmatpush.msra.mxu0 0.0
        %1013 = vmatpush.msra.mxu0 0.0
        %1014 = vmatpush.msra.mxu0 0.0
        %1015 = vmatpush.msra.mxu0 0.0
        %1016 = vmatpush.msra.mxu0 0.0
        %1017 = vmatpush.msra.mxu0 0.0
        %1018 = vmatpush.msra.mxu0 0.0
        %1019 = vmatpush.msra.mxu0 0.0
        %1020 = vmatpush.msra.mxu0 0.0
        %1021 = vmatpush.msra.mxu0 0.0
        %1022 = vmatpush.msra.mxu0 0.0
        %1023 = vmatpush.msra.mxu0 %v975
        %1024 = vmatpush.msra.mxu0 %v952
        %1025 = vmatmul.f32.gmra.mxu0 %v959
        %v1026 = vpop.f32.mrf.mxu0
        %v1027 = vadd.f32 0.0, %v1026
        %1028 = vmatmul.f32.gmra.mxu0 %v962
        %v1029 = vpop.f32.mrf.mxu0
        %v1030 = vadd.f32 0.0, %v1029
        %1031 = vmatmul.f32.gmra.mxu0 %v965
        %v1032 = vpop.f32.mrf.mxu0
        %v1033 = vadd.f32 0.0, %v1032
        %1034 = vmatmul.f32.gmra.mxu0 %v968
        %v1035 = vpop.f32.mrf.mxu0
        %v1036 = vadd.f32 0.0, %v1035
        %1037 = vdwg.mxu0
        %1038 = vmatpush.msra.mxu0 0.0
        %1039 = vmatpush.msra.mxu0 0.0
        %1040 = vmatpush.msra.mxu0 0.0
        %1041 = vmatpush.msra.mxu0 0.0
        %1042 = vmatpush.msra.mxu0 0.0
        %1043 = vmatpush.msra.mxu0 0.0
        %1044 = vmatpush.msra.mxu0 0.0
        %1045 = vmatpush.msra.mxu0 0.0
        %1046 = vmatpush.msra.mxu0 0.0
        %1047 = vmatpush.msra.mxu0 0.0
        %1048 = vmatpush.msra.mxu0 0.0
        %1049 = vmatpush.msra.mxu0 0.0
        %1050 = vmatpush.msra.mxu0 0.0
        %1051 = vmatpush.msra.mxu0 0.0
        %1052 = vmatpush.msra.mxu0 %v978
        %1053 = vmatpush.msra.mxu0 %v953
        %1054 = vmatmul.f32.gmra.mxu0 %v959
        %v1055 = vpop.f32.mrf.mxu0
        %v1056 = vadd.f32 0.0, %v1055
        %1057 = vmatmul.f32.gmra.mxu0 %v962
        %v1058 = vpop.f32.mrf.mxu0
        %v1059 = vadd.f32 0.0, %v1058
        %1060 = vmatmul.f32.gmra.mxu0 %v965
        %v1061 = vpop.f32.mrf.mxu0
        %v1062 = vadd.f32 0.0, %v1061
        %1063 = vmatmul.f32.gmra.mxu0 %v968
        %v1064 = vpop.f32.mrf.mxu0
        %v1065 = vadd.f32 0.0, %v1064
        %1066 = vdwg.mxu0
        %1067 = vst [vmem:[%s192] sm:$0xff] %v998
        %1068 = vst [vmem:[%s192 + $0x8] sm:$0xff] %v1027
        %1069 = vst.msk [vmem:[%s192 + $0x10] sm:$0xff] %vm313, %v1056
        %1070 = vst [vmem:[%s192 + $0x18] sm:$0xff] %v1001
        %1071 = vst [vmem:[%s192 + $0x20] sm:$0xff] %v1030
        %1072 = vst.msk [vmem:[%s192 + $0x28] sm:$0xff] %vm313, %v1059
        %1073 = vst [vmem:[%s192 + $0x30] sm:$0xff] %v1004
        %1074 = vst [vmem:[%s192 + $0x38] sm:$0xff] %v1033
        %1075 = vst.msk [vmem:[%s192 + $0x40] sm:$0xff] %vm313, %v1062
        %1076 = vst [vmem:[%s192 + $0x48] sm:$0xff] %v1007
        %1077 = vst [vmem:[%s192 + $0x50] sm:$0xff] %v1036
        %1078 = vst.msk [vmem:[%s192 + $0x58] sm:$0xff] %vm313, %v1065
        %p1079 = scmp.lt.s32.totalorder %s17, 1
        %s1080 = scalar_select %p1079, %s17, 1
        %s1081 = smul.addr %s1080, 12
        %s1082 = smul.addr %s1081, 8
        %s1083 = scalar_lea.vmem %s3, %s1082
        // Predicated region
        $region37: #{conv1_forward.1} parent=31 // pred_check
          %p1084 = pneg %p103
        $region38: #{conv1_forward.1} parent=31 // pred_check_branch
          %1086 = sbr.rel (%p1084) target = $region40
        $region39: #{conv1_forward.1} parent=31 // pred_region
          _
        $region40: #{conv1_forward.1} parent=31 // pred_fallthru
          _
      $region32: #{conv1_forward.1} parent=5 // pred_fallthru
        _
      %p1087 = scmp.le.s32.totalorder 2, %s12
      // Predicated region
      $region41: #{conv1_forward.1} parent=5 // pred_check
        %p1088 = pneg %p1087
      $region42: #{conv1_forward.1} parent=5 // pred_check_branch
        %1090 = sbr.rel (%p1088) target = $region44
      $region43: #{conv1_forward.1} parent=5 // pred_region
        %s1091 = ssub.s32 %s12, 2
        // Predicated region
        $region45: #{conv1_forward.1} parent=43 // pred_check
          %p1092 = pneg %p109
        $region46: #{conv1_forward.1} parent=43 // pred_check_branch
          %1094 = sbr.rel (%p1092) target = $region48
        $region47: #{conv1_forward.1} parent=43 // pred_region
          %p1095 = scmp.lt.s32.totalorder %s18, 1
          %s1096 = scalar_select %p1095, %s18, 1
          %s1097 = smul.addr %s1096, 12
          %s1098 = smul.addr %s1097, 8
          %s1099 = scalar_lea.vmem %s3, %s1098
        $region48: #{conv1_forward.1} parent=43 // pred_fallthru
          _
      $region44: #{conv1_forward.1} parent=5 // pred_fallthru
        _
    $region6: #{conv1_forward.1} parent=1 // loop_footer
      %s16 = sadd.s32 1, %s12
    $region7: #{conv1_forward.1} parent=1 // loop_footer_branch
      %11 = sbr.rel target = $region3
    $region8: #{conv1_forward.1} parent=1 // loop_exit
      _
    %1100 = vsyncpa [#allocation5], 1
    %s1101 = scalar_lea.sflag [#allocation5], 1
    %1102 = vsyncpa %s1101, 1

</llo_original>
